<compile_context>
chip_gen: v6e
topology: v6e:2x2x1
jax: 0.10.0
libtpu: 0.0.40
codegen_flags: <defaults>
</compile_context>

<pallas_src>
import functools

import jax
import jax.numpy as jnp
import numpy as np
from jax.experimental import pallas as pl
from jax.experimental.pallas import tpu as pltpu


def _self_attention_kernel(x_ref, wq_ref, wk_ref, wv_ref, wo_ref, bo_ref, o_ref, *, h):
    """One grid step = one batch element; all heads processed via batched einsums.

    Blocks seen by the kernel:
      x_ref : (1, M, D)        bf16 input for this batch element
      wq_ref: (h, D, sk)       bf16, per-head, pre-transposed, pre-scaled by 1/sqrt(sk)
      wk_ref: (h, D, sk)       bf16
      wv_ref: (h, D, sv)       bf16
      wo_ref: (h, sv, OUT)     bf16, per-head slices of the output projection
      bo_ref: (1, OUT)         f32 output projection bias
      o_ref : (M, OUT)         f32 output rows for this batch element
    """
    f32 = jnp.float32
    bf16 = jnp.bfloat16
    _, m, d = x_ref.shape

    # Leading-dim broadcast only (cheap, no lane/sublane relayout): make h a true
    # batch axis so every matmul below is a plain head-batched dot_general.
    xh = jnp.broadcast_to(x_ref[...], (h, m, d))                       # (h, M, D) bf16

    # Per-head projections (bf16 MXU, f32 accumulation).
    q = jnp.einsum("hmd,hdk->hmk", xh, wq_ref[...], preferred_element_type=f32)
    k = jnp.einsum("hmd,hdk->hmk", xh, wk_ref[...], preferred_element_type=f32)
    v = jnp.einsum("hmd,hdk->hmk", xh, wv_ref[...], preferred_element_type=f32)

    # Scaled dot-product attention, batched over heads. 1/sqrt(sk) is already
    # folded into wq. Softmax math stays in f32 (v5e VPU/EUP has no bf16).
    logits = jnp.einsum("hmk,hnk->hmn", q.astype(bf16), k.astype(bf16),
                        preferred_element_type=f32)                    # (h, M, M)
    mx = jnp.max(logits, axis=-1, keepdims=True)
    p = jnp.exp(logits - mx)
    denom = jnp.sum(p, axis=-1, keepdims=True)
    w = p * pl.reciprocal(denom, approx=True)                          # EUP slot

    attn = jnp.einsum("hmn,hnd->hmd", w.astype(bf16), v.astype(bf16),
                      preferred_element_type=f32)                      # (h, M, sv)

    # Output projection: head-batched matmul + sum over the outer head axis
    # replaces concat_heads(attn) @ Wo^T — no lane concatenation materialized.
    yh = jnp.einsum("hmd,hdo->hmo", attn.astype(bf16), wo_ref[...],
                    preferred_element_type=f32)                        # (h, M, OUT)
    o_ref[...] = jnp.sum(yh, axis=0) + bo_ref[...]


def prepare_self_attention_params(wq, wk, wv, wo, bo, *, h, sk, sv,
                                  param_dtype=jnp.bfloat16):
    """One-time parameter preparation (hoisted out of the per-call path).

    Inputs are in PyTorch nn.Linear layout:
      wq, wk: (h*sk, D)   wv: (h*sv, D)   wo: (out_size, h*sv)   bo: (out_size,)
    Returns per-head, pre-transposed, bf16 weights; query weights pre-scaled by
    the 1/sqrt(sk) attention temperature.
    """
    D = wq.shape[1]
    out_size = wo.shape[0]
    inv_temp = jnp.float32(1.0 / np.sqrt(sk))

    wq3 = (wq.astype(jnp.float32) * inv_temp).reshape(h, sk, D)
    wq3 = jnp.transpose(wq3, (0, 2, 1)).astype(param_dtype)            # (h, D, sk)
    wk3 = jnp.transpose(wk.astype(jnp.float32).reshape(h, sk, D),
                        (0, 2, 1)).astype(param_dtype)                 # (h, D, sk)
    wv3 = jnp.transpose(wv.astype(jnp.float32).reshape(h, sv, D),
                        (0, 2, 1)).astype(param_dtype)                 # (h, D, sv)
    wo3 = wo.astype(jnp.float32).T.reshape(h, sv, out_size).astype(param_dtype)
    bo2 = bo.astype(jnp.float32).reshape(1, out_size)
    return wq3, wk3, wv3, wo3, bo2


def self_attention_pallas(x, params, *, h, sk, sv, out_size):
    """x: (B, M, D) float32.  params: output of prepare_self_attention_params."""
    wq3, wk3, wv3, wo3, bo2 = params
    B, M, D = x.shape
    x_bf = x.astype(jnp.bfloat16)

    kernel = functools.partial(_self_attention_kernel, h=h)

    y2 = pl.pallas_call(
        kernel,
        # Lane-contiguous 2-D output slab; reshaped to (B, M, out) for free below.
        out_shape=jax.ShapeDtypeStruct((B * M, out_size), jnp.float32),
        grid_spec=pltpu.PrefetchScalarGridSpec(
            num_scalar_prefetch=0,
            grid=(B,),                                  # one batch element per step
            in_specs=[
                pl.BlockSpec((1, M, D), lambda b: (b, 0, 0)),
                # Grid-invariant weights: constant index_map => no per-step re-DMA.
                pl.BlockSpec((h, D, sk), lambda b: (0, 0, 0)),
                pl.BlockSpec((h, D, sk), lambda b: (0, 0, 0)),
                pl.BlockSpec((h, D, sv), lambda b: (0, 0, 0)),
                pl.BlockSpec((h, sv, out_size), lambda b: (0, 0, 0)),
                pl.BlockSpec((1, out_size), lambda b: (0, 0)),
            ],
            out_specs=pl.BlockSpec((M, out_size), lambda b: (b, 0)),
        ),
        compiler_params=pltpu.CompilerParams(
            dimension_semantics=("parallel",)),          # v7x: both TCs split batches
    )(x_bf, wq3, wk3, wv3, wo3, bo2)

    y = y2.reshape(B, M, out_size)
    # PyTorch: .squeeze(dim=1) — only effective when M == 1.
    if M == 1:
        y = jnp.squeeze(y, axis=1)
    return y


def self_attention_ref(x, wq, wk, wv, wo, bo, *, h, sk, sv, out_size):
    """Pure-JAX f32 reference mirroring the PyTorch math (nn.Linear weight layout)."""
    B, M, D = x.shape
    q = (x @ wq.T).reshape(B, M, h, sk).transpose(0, 2, 1, 3)          # (B, h, M, sk)
    k = (x @ wk.T).reshape(B, M, h, sk).transpose(0, 2, 1, 3)
    v = (x @ wv.T).reshape(B, M, h, sv).transpose(0, 2, 1, 3)
    logits = jnp.einsum("bhmd,bhnd->bhmn", q, k) / jnp.sqrt(jnp.float32(sk))
    w = jax.nn.softmax(logits, axis=-1)
    attn = jnp.einsum("bhmn,bhnd->bhmd", w, v)                         # (B, h, M, sv)
    concat = attn.transpose(0, 2, 1, 3).reshape(B, M, h * sv)
    y = concat @ wo.T + jnp.reshape(bo, (1, out_size))
    if M == 1:
        y = jnp.squeeze(y, axis=1)
    return y


if __name__ == "__main__":
    # Module hyperparameters (SelfAttention(input_size, out_size, h, sk)).
    B, M = 2, 8
    input_size = 32
    out_size = 32
    h = 4
    sk = 8
    sv = sk  # default when sv is None

    key = jax.random.PRNGKey(0)
    kx, kq, kk, kv, ko, kb = jax.random.split(key, 6)

    x = jax.random.normal(kx, (B, M, input_size), dtype=jnp.float32)

    # Deterministic synthetic parameters in PyTorch nn.Linear weight layout.
    scale_in = 1.0 / np.sqrt(input_size)
    wq = jax.random.uniform(kq, (h * sk, input_size), jnp.float32, -scale_in, scale_in)
    wk = jax.random.uniform(kk, (h * sk, input_size), jnp.float32, -scale_in, scale_in)
    wv = jax.random.uniform(kv, (h * sv, input_size), jnp.float32, -scale_in, scale_in)
    scale_o = 1.0 / np.sqrt(h * sv)
    wo = jax.random.uniform(ko, (out_size, h * sv), jnp.float32, -scale_o, scale_o)
    bo = jax.random.uniform(kb, (out_size,), jnp.float32, -scale_o, scale_o)

    # Weight fusion/transpose/scaling/bf16 cast done ONCE, outside the forward path.
    params = prepare_self_attention_params(wq, wk, wv, wo, bo, h=h, sk=sk, sv=sv)
    params = jax.tree_util.tree_map(jax.block_until_ready, params)

    y = self_attention_pallas(x, params, h=h, sk=sk, sv=sv, out_size=out_size)
    y = jax.block_until_ready(y)

    y_ref = self_attention_ref(x, wq, wk, wv, wo, bo,
                               h=h, sk=sk, sv=sv, out_size=out_size)
    # Tolerance accommodates bf16 matmul operands (f32 accumulation) and the EUP
    # approximate reciprocal in the softmax normalization; outputs are O(0.1-1),
    # observed deviations are ~1e-2, so this still catches any structural bug.
    np.testing.assert_allclose(np.asarray(y), np.asarray(y_ref),
                               rtol=3e-2, atol=3e-2)

    print("KERNEL_OK")
</pallas_src>

<mosaic_0001>
module attributes {stable_mosaic.version = 11 : i64} {
  func.func @_self_attention_kernel(%arg0: i32, %arg1: memref<1x8x32xbf16, #tpu.memory_space<vmem>>, %arg2: memref<4x32x8xbf16, #tpu.memory_space<vmem>>, %arg3: memref<4x32x8xbf16, #tpu.memory_space<vmem>>, %arg4: memref<4x32x8xbf16, #tpu.memory_space<vmem>>, %arg5: memref<4x8x32xbf16, #tpu.memory_space<vmem>>, %arg6: memref<1x32xf32, #tpu.memory_space<vmem>>, %arg7: memref<8x32xf32, #tpu.memory_space<vmem>>) attributes {dimension_semantics = [#tpu.dimension_semantics<parallel>], iteration_bounds = array<i64: 2>, scalar_prefetch = 0 : i64, scratch_operands = 0 : i64, tpu.core_type = #tpu.core_type<tc>, window_params = [{transform_indices = @transform_0, window_bounds = array<i64: 1, 8, 32>}, {pipeline_mode = #tpu.pipeline_mode<synchronous>, transform_indices = @transform_1, window_bounds = array<i64: 4, 32, 8>}, {pipeline_mode = #tpu.pipeline_mode<synchronous>, transform_indices = @transform_2, window_bounds = array<i64: 4, 32, 8>}, {pipeline_mode = #tpu.pipeline_mode<synchronous>, transform_indices = @transform_3, window_bounds = array<i64: 4, 32, 8>}, {pipeline_mode = #tpu.pipeline_mode<synchronous>, transform_indices = @transform_4, window_bounds = array<i64: 4, 8, 32>}, {pipeline_mode = #tpu.pipeline_mode<synchronous>, transform_indices = @transform_5, window_bounds = array<i64: 1, 32>}, {transform_indices = @transform_6, window_bounds = array<i64: 8, 32>}]} {
    %c0 = arith.constant 0 : index
    %c0_0 = arith.constant 0 : index
    %c0_1 = arith.constant 0 : index
    %0 = vector.load %arg1[%c0, %c0_0, %c0_1] : memref<1x8x32xbf16, #tpu.memory_space<vmem>>, vector<1x8x32xbf16>
    %1 = vector.shape_cast %0 : vector<1x8x32xbf16> to vector<1x8x32xbf16>
    %2 = vector.broadcast %1 : vector<1x8x32xbf16> to vector<4x8x32xbf16>
    %c0_2 = arith.constant 0 : index
    %c0_3 = arith.constant 0 : index
    %c0_4 = arith.constant 0 : index
    %3 = vector.load %arg2[%c0_2, %c0_3, %c0_4] : memref<4x32x8xbf16, #tpu.memory_space<vmem>>, vector<4x32x8xbf16>
    "tpu.trace_start"() <{level = 10 : i32, message = "hmd,hdk->hmk"}> : () -> ()
    %cst = arith.constant dense<0.000000e+00> : vector<4x8x8xf32>
    %4 = tpu.matmul %2, %3, %cst {dimension_numbers = #tpu.dot_dimension_numbers<[2], [1], [1], [2], [0, 0, 0, 1, 1, 2], [0], [0]>} : vector<4x8x32xbf16>, vector<4x32x8xbf16>, vector<4x8x8xf32> -> vector<4x8x8xf32>
    "tpu.trace_stop"() : () -> ()
    %c0_5 = arith.constant 0 : index
    %c0_6 = arith.constant 0 : index
    %c0_7 = arith.constant 0 : index
    %5 = vector.load %arg3[%c0_5, %c0_6, %c0_7] : memref<4x32x8xbf16, #tpu.memory_space<vmem>>, vector<4x32x8xbf16>
    "tpu.trace_start"() <{level = 10 : i32, message = "hmd,hdk->hmk"}> : () -> ()
    %cst_8 = arith.constant dense<0.000000e+00> : vector<4x8x8xf32>
    %6 = tpu.matmul %2, %5, %cst_8 {dimension_numbers = #tpu.dot_dimension_numbers<[2], [1], [1], [2], [0, 0, 0, 1, 1, 2], [0], [0]>} : vector<4x8x32xbf16>, vector<4x32x8xbf16>, vector<4x8x8xf32> -> vector<4x8x8xf32>
    "tpu.trace_stop"() : () -> ()
    %c0_9 = arith.constant 0 : index
    %c0_10 = arith.constant 0 : index
    %c0_11 = arith.constant 0 : index
    %7 = vector.load %arg4[%c0_9, %c0_10, %c0_11] : memref<4x32x8xbf16, #tpu.memory_space<vmem>>, vector<4x32x8xbf16>
    "tpu.trace_start"() <{level = 10 : i32, message = "hmd,hdk->hmk"}> : () -> ()
    %cst_12 = arith.constant dense<0.000000e+00> : vector<4x8x8xf32>
    %8 = tpu.matmul %2, %7, %cst_12 {dimension_numbers = #tpu.dot_dimension_numbers<[2], [1], [1], [2], [0, 0, 0, 1, 1, 2], [0], [0]>} : vector<4x8x32xbf16>, vector<4x32x8xbf16>, vector<4x8x8xf32> -> vector<4x8x8xf32>
    "tpu.trace_stop"() : () -> ()
    %9 = arith.truncf %4 : vector<4x8x8xf32> to vector<4x8x8xbf16>
    %10 = arith.truncf %6 : vector<4x8x8xf32> to vector<4x8x8xbf16>
    "tpu.trace_start"() <{level = 10 : i32, message = "hmk,hnk->hmn"}> : () -> ()
    %cst_13 = arith.constant dense<0.000000e+00> : vector<4x8x8xf32>
    %11 = tpu.matmul %9, %10, %cst_13 {dimension_numbers = #tpu.dot_dimension_numbers<[2], [2], [1], [1], [0, 0, 0, 1, 1, 1], [0], [0]>} : vector<4x8x8xbf16>, vector<4x8x8xbf16>, vector<4x8x8xf32> -> vector<4x8x8xf32>
    "tpu.trace_stop"() : () -> ()
    %cst_14 = arith.constant dense<0xFF800000> : vector<4x8xf32>
    %12 = vector.multi_reduction <maximumf>, %11, %cst_14 [2] : vector<4x8x8xf32> to vector<4x8xf32>
    %13 = vector.shape_cast %12 : vector<4x8xf32> to vector<4x8x1xf32>
    %14 = vector.broadcast %13 : vector<4x8x1xf32> to vector<4x8x8xf32>
    %15 = arith.subf %11, %14 : vector<4x8x8xf32>
    %16 = math.exp %15 : vector<4x8x8xf32>
    %cst_15 = arith.constant dense<0.000000e+00> : vector<4x8xf32>
    %17 = vector.multi_reduction <add>, %16, %cst_15 [2] : vector<4x8x8xf32> to vector<4x8xf32>
    %18 = vector.shape_cast %17 : vector<4x8xf32> to vector<4x8x1xf32>
    %19 = tpu.reciprocal %18 {approx = true} : vector<4x8x1xf32> -> vector<4x8x1xf32>
    %20 = vector.broadcast %19 : vector<4x8x1xf32> to vector<4x8x8xf32>
    %21 = arith.mulf %16, %20 : vector<4x8x8xf32>
    %22 = arith.truncf %21 : vector<4x8x8xf32> to vector<4x8x8xbf16>
    %23 = arith.truncf %8 : vector<4x8x8xf32> to vector<4x8x8xbf16>
    "tpu.trace_start"() <{level = 10 : i32, message = "hmn,hnd->hmd"}> : () -> ()
    %cst_16 = arith.constant dense<0.000000e+00> : vector<4x8x8xf32>
    %24 = tpu.matmul %22, %23, %cst_16 {dimension_numbers = #tpu.dot_dimension_numbers<[2], [1], [1], [2], [0, 0, 0, 1, 1, 2], [0], [0]>} : vector<4x8x8xbf16>, vector<4x8x8xbf16>, vector<4x8x8xf32> -> vector<4x8x8xf32>
    "tpu.trace_stop"() : () -> ()
    %25 = arith.truncf %24 : vector<4x8x8xf32> to vector<4x8x8xbf16>
    %c0_17 = arith.constant 0 : index
    %c0_18 = arith.constant 0 : index
    %c0_19 = arith.constant 0 : index
    %26 = vector.load %arg5[%c0_17, %c0_18, %c0_19] : memref<4x8x32xbf16, #tpu.memory_space<vmem>>, vector<4x8x32xbf16>
    "tpu.trace_start"() <{level = 10 : i32, message = "hmd,hdo->hmo"}> : () -> ()
    %cst_20 = arith.constant dense<0.000000e+00> : vector<4x8x32xf32>
    %27 = tpu.matmul %25, %26, %cst_20 {dimension_numbers = #tpu.dot_dimension_numbers<[2], [1], [1], [2], [0, 0, 0, 1, 1, 2], [0], [0]>} : vector<4x8x8xbf16>, vector<4x8x32xbf16>, vector<4x8x32xf32> -> vector<4x8x32xf32>
    "tpu.trace_stop"() : () -> ()
    %cst_21 = arith.constant dense<0.000000e+00> : vector<8x32xf32>
    %28 = vector.multi_reduction <add>, %27, %cst_21 [0] : vector<4x8x32xf32> to vector<8x32xf32>
    %c0_22 = arith.constant 0 : index
    %c0_23 = arith.constant 0 : index
    %29 = vector.load %arg6[%c0_22, %c0_23] : memref<1x32xf32, #tpu.memory_space<vmem>>, vector<1x32xf32>
    %30 = vector.broadcast %29 : vector<1x32xf32> to vector<8x32xf32>
    %31 = arith.addf %28, %30 : vector<8x32xf32>
    %c0_24 = arith.constant 0 : index
    %c0_25 = arith.constant 0 : index
    %32 = vector.load %arg7[%c0_24, %c0_25] : memref<8x32xf32, #tpu.memory_space<vmem>>, vector<8x32xf32>
    tpu.vector_store %arg7[%c0_24, %c0_25], %31 {strides = array<i32>} : memref<8x32xf32, #tpu.memory_space<vmem>>, vector<8x32xf32>,
    return
  }
  func.func @transform_0(%arg0: i32) -> (i32, i32, i32) {
    %c0_i32 = arith.constant 0 : i32
    %c0_i32_0 = arith.constant 0 : i32
    %c0_i32_1 = arith.constant 0 : i32
    return %arg0, %c0_i32, %c0_i32_0 : i32, i32, i32
  }
  func.func @transform_1(%arg0: i32) -> (i32, i32, i32) {
    %c0_i32 = arith.constant 0 : i32
    %c0_i32_0 = arith.constant 0 : i32
    %c0_i32_1 = arith.constant 0 : i32
    %c0_i32_2 = arith.constant 0 : i32
    return %c0_i32, %c0_i32_0, %c0_i32_1 : i32, i32, i32
  }
  func.func @transform_2(%arg0: i32) -> (i32, i32, i32) {
    %c0_i32 = arith.constant 0 : i32
    %c0_i32_0 = arith.constant 0 : i32
    %c0_i32_1 = arith.constant 0 : i32
    %c0_i32_2 = arith.constant 0 : i32
    return %c0_i32, %c0_i32_0, %c0_i32_1 : i32, i32, i32
  }
  func.func @transform_3(%arg0: i32) -> (i32, i32, i32) {
    %c0_i32 = arith.constant 0 : i32
    %c0_i32_0 = arith.constant 0 : i32
    %c0_i32_1 = arith.constant 0 : i32
    %c0_i32_2 = arith.constant 0 : i32
    return %c0_i32, %c0_i32_0, %c0_i32_1 : i32, i32, i32
  }
  func.func @transform_4(%arg0: i32) -> (i32, i32, i32) {
    %c0_i32 = arith.constant 0 : i32
    %c0_i32_0 = arith.constant 0 : i32
    %c0_i32_1 = arith.constant 0 : i32
    %c0_i32_2 = arith.constant 0 : i32
    return %c0_i32, %c0_i32_0, %c0_i32_1 : i32, i32, i32
  }
  func.func @transform_5(%arg0: i32) -> (i32, i32) {
    %c0_i32 = arith.constant 0 : i32
    %c0_i32_0 = arith.constant 0 : i32
    %c0_i32_1 = arith.constant 0 : i32
    return %c0_i32, %c0_i32_0 : i32, i32
  }
  func.func @transform_6(%arg0: i32) -> (i32, i32) {
    %c0_i32 = arith.constant 0 : i32
    %c0_i32_0 = arith.constant 0 : i32
    return %arg0, %c0_i32 : i32, i32
  }
}

</mosaic_0001>

<llo_original>
// kernel: tpu_custom_call.1
$region0: #{tpu_custom_call.1}
  #allocation0 [shape = 'u32[]', space=smem, size = 0x4, offset = 0x4, fixed_abs, tag = 'smem constant byte address 0x4 - core index']
  #allocation1 [shape = 'u32[144,128]{1,0:T(1,128)}', space=vmem, size = 0x12000, scoped, tag = 'internal scratch']
  %s0 = inlined_call_operand.vmem [shape: bf16[2,8,32], index: 0, kind: input, shape index: {}]
  %s1 = inlined_call_operand.vmem [shape: bf16[4,32,8], index: 1, kind: input, shape index: {}]
  %s2 = inlined_call_operand.vmem [shape: bf16[4,32,8], index: 2, kind: input, shape index: {}]
  %s3 = inlined_call_operand.vmem [shape: bf16[4,32,8], index: 3, kind: input, shape index: {}]
  %s4 = inlined_call_operand.vmem [shape: bf16[4,8,32], index: 4, kind: input, shape index: {}]
  %s5 = inlined_call_operand.vmem [shape: f32[1,32], index: 5, kind: input, shape index: {}]
  %s6 = inlined_call_operand.hbm [shape: f32[16,32], index: 6, kind: output, shape index: {}]
  %s7 = sld [smem:[#allocation0]]
  $region57: #{tpu_custom_call.1} parent=0
    _
  %s9 = ssub.s32 1, %s7
  %s10 = scalar_select 0, %s9, %s7
  $region1: #{tpu_custom_call.1} parent=0
    #allocation2 [shape = 'u8[8192]{0}', space=vmem, size = 0x2000, scoped, tag = 'output window, operand 0']
    #allocation3 [shape = 's32[2]{0}', space=sflag, size = 0x8, scoped, tag = 'scoped memory for tpu_custom_call.1']
    %11 = vsyncpa [#allocation3], 0
    %s12 = scalar_lea.sflag [#allocation3], 1
    %13 = vsyncpa %s12, 0
    loop: start=0, step=1, limit=4
    $region2: #{tpu_custom_call.1} parent=1 // loop_pre_header
      _
    $region3: #{tpu_custom_call.1} parent=1 // loop_header
      %s15 = sphi 0, %s19
      %p16 = scmp.ge.s32.totalorder %s15, 4
      %s25 = sphi 0, %s27
      %s28 = sphi 0, %s25
      %s29 = sphi 0, %s28
      %s45 = sphi 0, %s29
      %s49 = sphi 0, %s49
      %s51 = sphi 0, %s49
      %s52 = sphi 0, %s51
      %s66 = sphi 0, %s52
      %s70 = sphi 0, %s70
      %s72 = sphi 0, %s70
      %s73 = sphi 0, %s72
      %s87 = sphi 0, %s73
      %s91 = sphi 0, %s91
      %s93 = sphi 0, %s91
      %s94 = sphi 0, %s93
      %s108 = sphi 0, %s94
      %s112 = sphi 0, %s112
      %s114 = sphi 0, %s112
      %s115 = sphi 0, %s114
      %s129 = sphi 0, %s115
      %s133 = sphi 0, %s133
      %s135 = sphi 0, %s133
      %s136 = sphi 0, %s135
      %s150 = sphi 0, %s136
      %s156 = sphi 0, %s158
      %s159 = sphi 0, %s156
      %s160 = sphi 0, %s159
      %s176 = sphi 0, %s160
    $region4: #{tpu_custom_call.1} parent=1 // loop_header_branch
      %18 = sbr.rel (%p16) target = $region8
    $region5: #{tpu_custom_call.1} parent=1 // loop_body
      %s20 = ssub.s32 %s15, 1
      %s21 = ssub.s32 %s15, 2
      %s22 = sadd.s32 %s15, 1
      %s23 = ssub.s32 %s15, %s22
      %p24 = scmp.eq.s32.totalorder %s23, 0
      %s26 = sadd.s32 %s25, 1
      %s27 = scalar_select %p24, %s25, %s26
      %p30 = pneg %p24
      %p31 = scmp.eq.s32.totalorder %s15, 1
      %p32 = por %p30, %p31
      %p33 = scmp.ne.s32.totalorder %s25, %s28
      %p34 = scmp.eq.s32.totalorder %s15, 0
      %p35 = por %p33, %p34
      %p36 = scmp.ne.s32.totalorder %s25, %s28
      %p37 = scmp.eq.s32.totalorder %s20, 1
      %p38 = por %p36, %p37
      %p39 = scmp.ne.s32.totalorder %s28, %s29
      %p40 = scmp.eq.s32.totalorder %s20, 0
      %p41 = por %p39, %p40
      %p42 = scmp.ne.s32.totalorder %s28, %s29
      %p43 = scmp.eq.s32.totalorder %s21, 1
      %p44 = por %p42, %p43
      %p46 = scmp.ne.s32.totalorder %s29, %s45
      %p47 = scmp.eq.s32.totalorder %s21, 0
      %p48 = por %p46, %p47
      %s50 = sadd.s32 %s49, 1
      %p53 = scmp.eq.s32.totalorder %s15, 1
      %p54 = scmp.ne.s32.totalorder %s49, %s51
      %p55 = scmp.eq.s32.totalorder %s15, 0
      %p56 = por %p54, %p55
      %p57 = scmp.ne.s32.totalorder %s49, %s51
      %p58 = scmp.eq.s32.totalorder %s20, 1
      %p59 = por %p57, %p58
      %p60 = scmp.ne.s32.totalorder %s51, %s52
      %p61 = scmp.eq.s32.totalorder %s20, 0
      %p62 = por %p60, %p61
      %p63 = scmp.ne.s32.totalorder %s51, %s52
      %p64 = scmp.eq.s32.totalorder %s21, 1
      %p65 = por %p63, %p64
      %p67 = scmp.ne.s32.totalorder %s52, %s66
      %p68 = scmp.eq.s32.totalorder %s21, 0
      %p69 = por %p67, %p68
      %s71 = sadd.s32 %s70, 1
      %p74 = scmp.eq.s32.totalorder %s15, 1
      %p75 = scmp.ne.s32.totalorder %s70, %s72
      %p76 = scmp.eq.s32.totalorder %s15, 0
      %p77 = por %p75, %p76
      %p78 = scmp.ne.s32.totalorder %s70, %s72
      %p79 = scmp.eq.s32.totalorder %s20, 1
      %p80 = por %p78, %p79
      %p81 = scmp.ne.s32.totalorder %s72, %s73
      %p82 = scmp.eq.s32.totalorder %s20, 0
      %p83 = por %p81, %p82
      %p84 = scmp.ne.s32.totalorder %s72, %s73
      %p85 = scmp.eq.s32.totalorder %s21, 1
      %p86 = por %p84, %p85
      %p88 = scmp.ne.s32.totalorder %s73, %s87
      %p89 = scmp.eq.s32.totalorder %s21, 0
      %p90 = por %p88, %p89
      %s92 = sadd.s32 %s91, 1
      %p95 = scmp.eq.s32.totalorder %s15, 1
      %p96 = scmp.ne.s32.totalorder %s91, %s93
      %p97 = scmp.eq.s32.totalorder %s15, 0
      %p98 = por %p96, %p97
      %p99 = scmp.ne.s32.totalorder %s91, %s93
      %p100 = scmp.eq.s32.totalorder %s20, 1
      %p101 = por %p99, %p100
      %p102 = scmp.ne.s32.totalorder %s93, %s94
      %p103 = scmp.eq.s32.totalorder %s20, 0
      %p104 = por %p102, %p103
      %p105 = scmp.ne.s32.totalorder %s93, %s94
      %p106 = scmp.eq.s32.totalorder %s21, 1
      %p107 = por %p105, %p106
      %p109 = scmp.ne.s32.totalorder %s94, %s108
      %p110 = scmp.eq.s32.totalorder %s21, 0
      %p111 = por %p109, %p110
      %s113 = sadd.s32 %s112, 1
      %p116 = scmp.eq.s32.totalorder %s15, 1
      %p117 = scmp.ne.s32.totalorder %s112, %s114
      %p118 = scmp.eq.s32.totalorder %s15, 0
      %p119 = por %p117, %p118
      %p120 = scmp.ne.s32.totalorder %s112, %s114
      %p121 = scmp.eq.s32.totalorder %s20, 1
      %p122 = por %p120, %p121
      %p123 = scmp.ne.s32.totalorder %s114, %s115
      %p124 = scmp.eq.s32.totalorder %s20, 0
      %p125 = por %p123, %p124
      %p126 = scmp.ne.s32.totalorder %s114, %s115
      %p127 = scmp.eq.s32.totalorder %s21, 1
      %p128 = por %p126, %p127
      %p130 = scmp.ne.s32.totalorder %s115, %s129
      %p131 = scmp.eq.s32.totalorder %s21, 0
      %p132 = por %p130, %p131
      %s134 = sadd.s32 %s133, 1
      %p137 = scmp.eq.s32.totalorder %s15, 1
      %p138 = scmp.ne.s32.totalorder %s133, %s135
      %p139 = scmp.eq.s32.totalorder %s15, 0
      %p140 = por %p138, %p139
      %p141 = scmp.ne.s32.totalorder %s133, %s135
      %p142 = scmp.eq.s32.totalorder %s20, 1
      %p143 = por %p141, %p142
      %p144 = scmp.ne.s32.totalorder %s135, %s136
      %p145 = scmp.eq.s32.totalorder %s20, 0
      %p146 = por %p144, %p145
      %p147 = scmp.ne.s32.totalorder %s135, %s136
      %p148 = scmp.eq.s32.totalorder %s21, 1
      %p149 = por %p147, %p148
      %p151 = scmp.ne.s32.totalorder %s136, %s150
      %p152 = scmp.eq.s32.totalorder %s21, 0
      %p153 = por %p151, %p152
      %s154 = ssub.s32 %s15, %s22
      %p155 = scmp.eq.s32.totalorder %s154, 0
      %s157 = sadd.s32 %s156, 1
      %s158 = scalar_select %p155, %s156, %s157
      %p161 = pneg %p155
      %p162 = scmp.eq.s32.totalorder %s15, 1
      %p163 = por %p161, %p162
      %p164 = scmp.ne.s32.totalorder %s156, %s159
      %p165 = scmp.eq.s32.totalorder %s15, 0
      %p166 = por %p164, %p165
      %p167 = scmp.ne.s32.totalorder %s156, %s159
      %p168 = scmp.eq.s32.totalorder %s20, 1
      %p169 = por %p167, %p168
      %p170 = scmp.ne.s32.totalorder %s159, %s160
      %p171 = scmp.eq.s32.totalorder %s20, 0
      %p172 = por %p170, %p171
      %p173 = scmp.ne.s32.totalorder %s159, %s160
      %p174 = scmp.eq.s32.totalorder %s21, 1
      %p175 = por %p173, %p174
      %p177 = scmp.ne.s32.totalorder %s160, %s176
      %p178 = scmp.eq.s32.totalorder %s21, 0
      %p179 = por %p177, %p178
      %p180 = scmp.le.s32.totalorder 1, %s15
      %p181 = scmp.lt.s32.totalorder %s15, 3
      %p182 = pnand %p180, %p181
      %p183 = pneg %p182
      // Predicated region
      $region9: #{tpu_custom_call.1} parent=5 // pred_check
        _
      $region10: #{tpu_custom_call.1} parent=5 // pred_check_branch
        %185 = sbr.rel (%p182) target = $region12
      $region11: #{tpu_custom_call.1} parent=5 // pred_region
        %s186 = ssub.s32 %s15, 1
        // Predicated region
        $region13: #{tpu_custom_call.1} parent=11 // pred_check
          %p187 = pneg %p62
        $region14: #{tpu_custom_call.1} parent=11 // pred_check_branch
          %189 = sbr.rel (%p187) target = $region16
        $region15: #{tpu_custom_call.1} parent=11 // pred_region
          _
        $region16: #{tpu_custom_call.1} parent=11 // pred_fallthru
          _
        // Predicated region
        $region17: #{tpu_custom_call.1} parent=11 // pred_check
          %p190 = pneg %p83
        $region18: #{tpu_custom_call.1} parent=11 // pred_check_branch
          %192 = sbr.rel (%p190) target = $region20
        $region19: #{tpu_custom_call.1} parent=11 // pred_region
          _
        $region20: #{tpu_custom_call.1} parent=11 // pred_fallthru
          _
        // Predicated region
        $region21: #{tpu_custom_call.1} parent=11 // pred_check
          %p193 = pneg %p104
        $region22: #{tpu_custom_call.1} parent=11 // pred_check_branch
          %195 = sbr.rel (%p193) target = $region24
        $region23: #{tpu_custom_call.1} parent=11 // pred_region
          _
        $region24: #{tpu_custom_call.1} parent=11 // pred_fallthru
          _
        // Predicated region
        $region25: #{tpu_custom_call.1} parent=11 // pred_check
          %p196 = pneg %p125
        $region26: #{tpu_custom_call.1} parent=11 // pred_check_branch
          %198 = sbr.rel (%p196) target = $region28
        $region27: #{tpu_custom_call.1} parent=11 // pred_region
          _
        $region28: #{tpu_custom_call.1} parent=11 // pred_fallthru
          _
        // Predicated region
        $region29: #{tpu_custom_call.1} parent=11 // pred_check
          %p199 = pneg %p146
        $region30: #{tpu_custom_call.1} parent=11 // pred_check_branch
          %201 = sbr.rel (%p199) target = $region32
        $region31: #{tpu_custom_call.1} parent=11 // pred_region
          _
        $region32: #{tpu_custom_call.1} parent=11 // pred_fallthru
          _
      $region12: #{tpu_custom_call.1} parent=5 // pred_fallthru
        _
      %p202 = scmp.lt.s32.totalorder %s15, 2
      // Predicated region
      $region33: #{tpu_custom_call.1} parent=5 // pred_check
        %p203 = pneg %p202
      $region34: #{tpu_custom_call.1} parent=5 // pred_check_branch
        %205 = sbr.rel (%p203) target = $region36
      $region35: #{tpu_custom_call.1} parent=5 // pred_region
        // Predicated region
        $region37: #{tpu_custom_call.1} parent=35 // pred_check
          %p206 = pneg %p35
        $region38: #{tpu_custom_call.1} parent=35 // pred_check_branch
          %208 = sbr.rel (%p206) target = $region40
        $region39: #{tpu_custom_call.1} parent=35 // pred_region
          %p209 = scmp.lt.s32.totalorder %s15, 1
          %s210 = scalar_select %p209, %s15, 1
          %s211 = smul.addr %s210, 4
          %s212 = scalar_lea.vmem %s0, %s211
        $region40: #{tpu_custom_call.1} parent=35 // pred_fallthru
          _
      $region36: #{tpu_custom_call.1} parent=5 // pred_fallthru
        _
      %p213 = scmp.le.s32.totalorder 1, %s15
      %p214 = scmp.lt.s32.totalorder %s15, 3
      %p215 = pnand %p213, %p214
      %p216 = pneg %p215
      // Predicated region
      $region41: #{tpu_custom_call.1} parent=5 // pred_check
        _
      $region42: #{tpu_custom_call.1} parent=5 // pred_check_branch
        %218 = sbr.rel (%p215) target = $region44
      $region43: #{tpu_custom_call.1} parent=5 // pred_region
        %s219 = ssub.s32 %s15, 1
        %p220 = scmp.lt.s32.totalorder %s20, 1
        %s221 = scalar_select %p220, %s20, 1
        %s222 = smul.addr %s221, 4
        %s223 = scalar_lea.vmem %s0, %s222
        %p224 = pneg %p41
        %p225 = pneg %p38
        %p226 = pneg %p62
        %p227 = pneg %p59
        %p228 = pneg %p83
        %p229 = pneg %p80
        %p230 = pneg %p104
        %p231 = pneg %p101
        %p232 = pneg %p125
        %p233 = pneg %p122
        %p234 = pneg %p146
        %p235 = pneg %p143
        %p236 = pneg %p172
        %p237 = pneg %p169
        %s238 = sand.u32 %s159, 1
        %s239 = scalar_lea.sflag [#allocation3], %s238
        %s240 = sand.u32 %s159, 1
        %s241 = smul.addr %s240, 8
        %s242 = scalar_lea.vmem [#allocation2], %s241
        %p243 = scmp.lt.s32.totalorder %s20, 1
        %s244 = scalar_select %p243, %s20, 1
        %s245 = smul.addr %s244, 4
        %s246 = scalar_lea.vmem %s0, %s245
        %v248 = vld [vmem:[%s246] sm:$0xf]
        %v249 = vld [vmem:[%s1] sm:$0xf]
        %v250 = vld [vmem:[%s1 + $0x4] sm:$0xf]
        %v251 = vld [vmem:[%s1 + $0x8] sm:$0xf]
        %v252 = vld [vmem:[%s1 + $0xc] sm:$0xf]
        %v253 = vld [vmem:[%s1 + $0x10] sm:$0xf]
        %v254 = vld [vmem:[%s1 + $0x14] sm:$0xf]
        %v255 = vld [vmem:[%s1 + $0x18] sm:$0xf]
        %v256 = vld [vmem:[%s1 + $0x1c] sm:$0xf]
        %v257 = vld [vmem:[%s1 + $0x20] sm:$0xf]
        %v258 = vld [vmem:[%s1 + $0x24] sm:$0xf]
        %v259 = vld [vmem:[%s1 + $0x28] sm:$0xf]
        %v260 = vld [vmem:[%s1 + $0x2c] sm:$0xf]
        %v261 = vld [vmem:[%s1 + $0x30] sm:$0xf]
        %v262 = vld [vmem:[%s1 + $0x34] sm:$0xf]
        %v263 = vld [vmem:[%s1 + $0x38] sm:$0xf]
        %v264 = vld [vmem:[%s1 + $0x3c] sm:$0xf]
        %v269 = vunpack.c.l.b16 %v249
        %v270 = vunpack.c.l.b16 %v250
        %v271 = vunpack.c.l.b16 %v251
        %v272 = vunpack.c.l.b16 %v252
        %v273 = vpack.c.b16 %v270, %v269
        %v274 = vpack.c.b16 %v272, %v271
        %vm277 = vcmask 261120
        %v279 = vsel %vm277, %v248, 0
        %281 = vmatprep.subr.bf16.mxu0 0
        %282 = vmatpush1.bf16.msra.mxu0 0
        %283 = vmatprep.subr.bf16.mxu0 0
        %284 = vmatpush1.bf16.msra.mxu0 0
        %285 = vmatprep.subr.bf16.mxu0 0
        %286 = vmatpush1.bf16.msra.mxu0 0
        %287 = vmatprep.subr.bf16.mxu0 0
        %288 = vmatpush1.bf16.msra.mxu0 0
        %289 = vmatprep.subr.bf16.mxu0 0
        %290 = vmatpush1.bf16.msra.mxu0 0
        %291 = vmatprep.subr.bf16.mxu0 0
        %292 = vmatpush1.bf16.msra.mxu0 0
        %293 = vmatprep.subr.bf16.mxu0 0
        %294 = vmatpush1.bf16.msra.mxu0 %v274
        %295 = vmatprep.subr.bf16.mxu0 0
        %296 = vmatpush1.bf16.msra.mxu0 %v273
        %297 = vmatprep.subr.bf16.mxu0 0
        %298 = vmatpush2.bf16.msra.mxu0 0
        %299 = vmatprep.subr.bf16.mxu0 0
        %300 = vmatpush2.bf16.msra.mxu0 0
        %301 = vmatprep.subr.bf16.mxu0 0
        %302 = vmatpush2.bf16.msra.mxu0 0
        %303 = vmatprep.subr.bf16.mxu0 0
        %304 = vmatpush2.bf16.msra.mxu0 0
        %305 = vmatprep.subr.bf16.mxu0 0
        %306 = vmatpush2.bf16.msra.mxu0 0
        %307 = vmatprep.subr.bf16.mxu0 0
        %308 = vmatpush2.bf16.msra.mxu0 0
        %309 = vmatprep.subr.bf16.mxu0 0
        %310 = vmatpush2.bf16.msra.mxu0 0
        %311 = vmatprep.subr.bf16.mxu0 0
        %312 = vmatpush2.bf16.msra.mxu0 0
        %313 = vmatprep.mubr.bf16.mxu0 0
        %314 = vmatmul.mubr.bf16.gmra.mxu0 %v279
        %v315 = vpop.f32.mrf.mxu0
        %v316 = vadd.f32 0.0, %v315
        %v317 = vpop.f32.mrf.mxu0
        %v318 = vpop.f32.mrf.mxu0
        %v319 = vpop.f32.mrf.mxu0
        %320 = vdwg.mxu0
        %v325 = vunpack.c.l.b16 %v253
        %v326 = vunpack.c.l.b16 %v254
        %v327 = vunpack.c.l.b16 %v255
        %v328 = vunpack.c.l.b16 %v256
        %v329 = vpack.c.b16 %v326, %v325
        %v330 = vpack.c.b16 %v328, %v327
        %333 = vmatprep.subr.bf16.mxu0 0
        %334 = vmatpush1.bf16.msra.mxu0 0
        %335 = vmatprep.subr.bf16.mxu0 0
        %336 = vmatpush1.bf16.msra.mxu0 0
        %337 = vmatprep.subr.bf16.mxu0 0
        %338 = vmatpush1.bf16.msra.mxu0 0
        %339 = vmatprep.subr.bf16.mxu0 0
        %340 = vmatpush1.bf16.msra.mxu0 0
        %341 = vmatprep.subr.bf16.mxu0 0
        %342 = vmatpush1.bf16.msra.mxu0 0
        %343 = vmatprep.subr.bf16.mxu0 0
        %344 = vmatpush1.bf16.msra.mxu0 0
        %345 = vmatprep.subr.bf16.mxu0 0
        %346 = vmatpush1.bf16.msra.mxu0 %v330
        %347 = vmatprep.subr.bf16.mxu0 0
        %348 = vmatpush1.bf16.msra.mxu0 %v329
        %349 = vmatprep.subr.bf16.mxu0 0
        %350 = vmatpush2.bf16.msra.mxu0 0
        %351 = vmatprep.subr.bf16.mxu0 0
        %352 = vmatpush2.bf16.msra.mxu0 0
        %353 = vmatprep.subr.bf16.mxu0 0
        %354 = vmatpush2.bf16.msra.mxu0 0
        %355 = vmatprep.subr.bf16.mxu0 0
        %356 = vmatpush2.bf16.msra.mxu0 0
        %357 = vmatprep.subr.bf16.mxu0 0
        %358 = vmatpush2.bf16.msra.mxu0 0
        %359 = vmatprep.subr.bf16.mxu0 0
        %360 = vmatpush2.bf16.msra.mxu0 0
        %361 = vmatprep.subr.bf16.mxu0 0
        %362 = vmatpush2.bf16.msra.mxu0 0
        %363 = vmatprep.subr.bf16.mxu0 0
        %364 = vmatpush2.bf16.msra.mxu0 0
        %365 = vmatprep.mubr.bf16.mxu0 0
        %366 = vmatmul.mubr.bf16.gmra.mxu0 %v279
        %v367 = vpop.f32.mrf.mxu0
        %v368 = vadd.f32 0.0, %v367
        %v369 = vpop.f32.mrf.mxu0
        %v370 = vpop.f32.mrf.mxu0
        %v371 = vpop.f32.mrf.mxu0
        %372 = vdwg.mxu0
        %v377 = vunpack.c.l.b16 %v257
        %v378 = vunpack.c.l.b16 %v258
        %v379 = vunpack.c.l.b16 %v259
        %v380 = vunpack.c.l.b16 %v260
        %v381 = vpack.c.b16 %v378, %v377
        %v382 = vpack.c.b16 %v380, %v379
        %385 = vmatprep.subr.bf16.mxu0 0
        %386 = vmatpush1.bf16.msra.mxu0 0
        %387 = vmatprep.subr.bf16.mxu0 0
        %388 = vmatpush1.bf16.msra.mxu0 0
        %389 = vmatprep.subr.bf16.mxu0 0
        %390 = vmatpush1.bf16.msra.mxu0 0
        %391 = vmatprep.subr.bf16.mxu0 0
        %392 = vmatpush1.bf16.msra.mxu0 0
        %393 = vmatprep.subr.bf16.mxu0 0
        %394 = vmatpush1.bf16.msra.mxu0 0
        %395 = vmatprep.subr.bf16.mxu0 0
        %396 = vmatpush1.bf16.msra.mxu0 0
        %397 = vmatprep.subr.bf16.mxu0 0
        %398 = vmatpush1.bf16.msra.mxu0 %v382
        %399 = vmatprep.subr.bf16.mxu0 0
        %400 = vmatpush1.bf16.msra.mxu0 %v381
        %401 = vmatprep.subr.bf16.mxu0 0
        %402 = vmatpush2.bf16.msra.mxu0 0
        %403 = vmatprep.subr.bf16.mxu0 0
        %404 = vmatpush2.bf16.msra.mxu0 0
        %405 = vmatprep.subr.bf16.mxu0 0
        %406 = vmatpush2.bf16.msra.mxu0 0
        %407 = vmatprep.subr.bf16.mxu0 0
        %408 = vmatpush2.bf16.msra.mxu0 0
        %409 = vmatprep.subr.bf16.mxu0 0
        %410 = vmatpush2.bf16.msra.mxu0 0
        %411 = vmatprep.subr.bf16.mxu0 0
        %412 = vmatpush2.bf16.msra.mxu0 0
        %413 = vmatprep.subr.bf16.mxu0 0
        %414 = vmatpush2.bf16.msra.mxu0 0
        %415 = vmatprep.subr.bf16.mxu0 0
        %416 = vmatpush2.bf16.msra.mxu0 0
        %417 = vmatprep.mubr.bf16.mxu0 0
        %418 = vmatmul.mubr.bf16.gmra.mxu0 %v279
        %v419 = vpop.f32.mrf.mxu0
        %v420 = vadd.f32 0.0, %v419
        %v421 = vpop.f32.mrf.mxu0
        %v422 = vpop.f32.mrf.mxu0
        %v423 = vpop.f32.mrf.mxu0
        %424 = vdwg.mxu0
        %v429 = vunpack.c.l.b16 %v261
        %v430 = vunpack.c.l.b16 %v262
        %v431 = vunpack.c.l.b16 %v263
        %v432 = vunpack.c.l.b16 %v264
        %v433 = vpack.c.b16 %v430, %v429
        %v434 = vpack.c.b16 %v432, %v431
        %437 = vmatprep.subr.bf16.mxu0 0
        %438 = vmatpush1.bf16.msra.mxu0 0
        %439 = vmatprep.subr.bf16.mxu0 0
        %440 = vmatpush1.bf16.msra.mxu0 0
        %441 = vmatprep.subr.bf16.mxu0 0
        %442 = vmatpush1.bf16.msra.mxu0 0
        %443 = vmatprep.subr.bf16.mxu0 0
        %444 = vmatpush1.bf16.msra.mxu0 0
        %445 = vmatprep.subr.bf16.mxu0 0
        %446 = vmatpush1.bf16.msra.mxu0 0
        %447 = vmatprep.subr.bf16.mxu0 0
        %448 = vmatpush1.bf16.msra.mxu0 0
        %449 = vmatprep.subr.bf16.mxu0 0
        %450 = vmatpush1.bf16.msra.mxu0 %v434
        %451 = vmatprep.subr.bf16.mxu0 0
        %452 = vmatpush1.bf16.msra.mxu0 %v433
        %453 = vmatprep.subr.bf16.mxu0 0
        %454 = vmatpush2.bf16.msra.mxu0 0
        %455 = vmatprep.subr.bf16.mxu0 0
        %456 = vmatpush2.bf16.msra.mxu0 0
        %457 = vmatprep.subr.bf16.mxu0 0
        %458 = vmatpush2.bf16.msra.mxu0 0
        %459 = vmatprep.subr.bf16.mxu0 0
        %460 = vmatpush2.bf16.msra.mxu0 0
        %461 = vmatprep.subr.bf16.mxu0 0
        %462 = vmatpush2.bf16.msra.mxu0 0
        %463 = vmatprep.subr.bf16.mxu0 0
        %464 = vmatpush2.bf16.msra.mxu0 0
        %465 = vmatprep.subr.bf16.mxu0 0
        %466 = vmatpush2.bf16.msra.mxu0 0
        %467 = vmatprep.subr.bf16.mxu0 0
        %468 = vmatpush2.bf16.msra.mxu0 0
        %469 = vmatprep.mubr.bf16.mxu0 0
        %470 = vmatmul.mubr.bf16.gmra.mxu0 %v279
        %v471 = vpop.f32.mrf.mxu0
        %v472 = vadd.f32 0.0, %v471
        %v473 = vpop.f32.mrf.mxu0
        %v474 = vpop.f32.mrf.mxu0
        %v475 = vpop.f32.mrf.mxu0
        %476 = vdwg.mxu0
        %v477 = vld [vmem:[%s2] sm:$0xf]
        %v478 = vld [vmem:[%s2 + $0x4] sm:$0xf]
        %v479 = vld [vmem:[%s2 + $0x8] sm:$0xf]
        %v480 = vld [vmem:[%s2 + $0xc] sm:$0xf]
        %v481 = vld [vmem:[%s2 + $0x10] sm:$0xf]
        %v482 = vld [vmem:[%s2 + $0x14] sm:$0xf]
        %v483 = vld [vmem:[%s2 + $0x18] sm:$0xf]
        %v484 = vld [vmem:[%s2 + $0x1c] sm:$0xf]
        %v485 = vld [vmem:[%s2 + $0x20] sm:$0xf]
        %v486 = vld [vmem:[%s2 + $0x24] sm:$0xf]
        %v487 = vld [vmem:[%s2 + $0x28] sm:$0xf]
        %v488 = vld [vmem:[%s2 + $0x2c] sm:$0xf]
        %v489 = vld [vmem:[%s2 + $0x30] sm:$0xf]
        %v490 = vld [vmem:[%s2 + $0x34] sm:$0xf]
        %v491 = vld [vmem:[%s2 + $0x38] sm:$0xf]
        %v492 = vld [vmem:[%s2 + $0x3c] sm:$0xf]
        %v497 = vunpack.c.l.b16 %v477
        %v498 = vunpack.c.l.b16 %v478
        %v499 = vunpack.c.l.b16 %v479
        %v500 = vunpack.c.l.b16 %v480
        %v501 = vpack.c.b16 %v498, %v497
        %v502 = vpack.c.b16 %v500, %v499
        %505 = vmatprep.subr.bf16.mxu0 0
        %506 = vmatpush1.bf16.msra.mxu0 0
        %507 = vmatprep.subr.bf16.mxu0 0
        %508 = vmatpush1.bf16.msra.mxu0 0
        %509 = vmatprep.subr.bf16.mxu0 0
        %510 = vmatpush1.bf16.msra.mxu0 0
        %511 = vmatprep.subr.bf16.mxu0 0
        %512 = vmatpush1.bf16.msra.mxu0 0
        %513 = vmatprep.subr.bf16.mxu0 0
        %514 = vmatpush1.bf16.msra.mxu0 0
        %515 = vmatprep.subr.bf16.mxu0 0
        %516 = vmatpush1.bf16.msra.mxu0 0
        %517 = vmatprep.subr.bf16.mxu0 0
        %518 = vmatpush1.bf16.msra.mxu0 %v502
        %519 = vmatprep.subr.bf16.mxu0 0
        %520 = vmatpush1.bf16.msra.mxu0 %v501
        %521 = vmatprep.subr.bf16.mxu0 0
        %522 = vmatpush2.bf16.msra.mxu0 0
        %523 = vmatprep.subr.bf16.mxu0 0
        %524 = vmatpush2.bf16.msra.mxu0 0
        %525 = vmatprep.subr.bf16.mxu0 0
        %526 = vmatpush2.bf16.msra.mxu0 0
        %527 = vmatprep.subr.bf16.mxu0 0
        %528 = vmatpush2.bf16.msra.mxu0 0
        %529 = vmatprep.subr.bf16.mxu0 0
        %530 = vmatpush2.bf16.msra.mxu0 0
        %531 = vmatprep.subr.bf16.mxu0 0
        %532 = vmatpush2.bf16.msra.mxu0 0
        %533 = vmatprep.subr.bf16.mxu0 0
        %534 = vmatpush2.bf16.msra.mxu0 0
        %535 = vmatprep.subr.bf16.mxu0 0
        %536 = vmatpush2.bf16.msra.mxu0 0
        %537 = vmatprep.mubr.bf16.mxu0 0
        %538 = vmatmul.mubr.bf16.gmra.mxu0 %v279
        %v539 = vpop.f32.mrf.mxu0
        %v540 = vadd.f32 0.0, %v539
        %v541 = vpop.f32.mrf.mxu0
        %v542 = vpop.f32.mrf.mxu0
        %v543 = vpop.f32.mrf.mxu0
        %544 = vdwg.mxu0
        %v549 = vunpack.c.l.b16 %v481
        %v550 = vunpack.c.l.b16 %v482
        %v551 = vunpack.c.l.b16 %v483
        %v552 = vunpack.c.l.b16 %v484
        %v553 = vpack.c.b16 %v550, %v549
        %v554 = vpack.c.b16 %v552, %v551
        %557 = vmatprep.subr.bf16.mxu0 0
        %558 = vmatpush1.bf16.msra.mxu0 0
        %559 = vmatprep.subr.bf16.mxu0 0
        %560 = vmatpush1.bf16.msra.mxu0 0
        %561 = vmatprep.subr.bf16.mxu0 0
        %562 = vmatpush1.bf16.msra.mxu0 0
        %563 = vmatprep.subr.bf16.mxu0 0
        %564 = vmatpush1.bf16.msra.mxu0 0
        %565 = vmatprep.subr.bf16.mxu0 0
        %566 = vmatpush1.bf16.msra.mxu0 0
        %567 = vmatprep.subr.bf16.mxu0 0
        %568 = vmatpush1.bf16.msra.mxu0 0
        %569 = vmatprep.subr.bf16.mxu0 0
        %570 = vmatpush1.bf16.msra.mxu0 %v554
        %571 = vmatprep.subr.bf16.mxu0 0
        %572 = vmatpush1.bf16.msra.mxu0 %v553
        %573 = vmatprep.subr.bf16.mxu0 0
        %574 = vmatpush2.bf16.msra.mxu0 0
        %575 = vmatprep.subr.bf16.mxu0 0
        %576 = vmatpush2.bf16.msra.mxu0 0
        %577 = vmatprep.subr.bf16.mxu0 0
        %578 = vmatpush2.bf16.msra.mxu0 0
        %579 = vmatprep.subr.bf16.mxu0 0
        %580 = vmatpush2.bf16.msra.mxu0 0
        %581 = vmatprep.subr.bf16.mxu0 0
        %582 = vmatpush2.bf16.msra.mxu0 0
        %583 = vmatprep.subr.bf16.mxu0 0
        %584 = vmatpush2.bf16.msra.mxu0 0
        %585 = vmatprep.subr.bf16.mxu0 0
        %586 = vmatpush2.bf16.msra.mxu0 0
        %587 = vmatprep.subr.bf16.mxu0 0
        %588 = vmatpush2.bf16.msra.mxu0 0
        %589 = vmatprep.mubr.bf16.mxu0 0
        %590 = vmatmul.mubr.bf16.gmra.mxu0 %v279
        %v591 = vpop.f32.mrf.mxu0
        %v592 = vadd.f32 0.0, %v591
        %v593 = vpop.f32.mrf.mxu0
        %v594 = vpop.f32.mrf.mxu0
        %v595 = vpop.f32.mrf.mxu0
        %596 = vdwg.mxu0
        %v601 = vunpack.c.l.b16 %v485
        %v602 = vunpack.c.l.b16 %v486
        %v603 = vunpack.c.l.b16 %v487
        %v604 = vunpack.c.l.b16 %v488
        %v605 = vpack.c.b16 %v602, %v601
        %v606 = vpack.c.b16 %v604, %v603
        %609 = vmatprep.subr.bf16.mxu0 0
        %610 = vmatpush1.bf16.msra.mxu0 0
        %611 = vmatprep.subr.bf16.mxu0 0
        %612 = vmatpush1.bf16.msra.mxu0 0
        %613 = vmatprep.subr.bf16.mxu0 0
        %614 = vmatpush1.bf16.msra.mxu0 0
        %615 = vmatprep.subr.bf16.mxu0 0
        %616 = vmatpush1.bf16.msra.mxu0 0
        %617 = vmatprep.subr.bf16.mxu0 0
        %618 = vmatpush1.bf16.msra.mxu0 0
        %619 = vmatprep.subr.bf16.mxu0 0
        %620 = vmatpush1.bf16.msra.mxu0 0
        %621 = vmatprep.subr.bf16.mxu0 0
        %622 = vmatpush1.bf16.msra.mxu0 %v606
        %623 = vmatprep.subr.bf16.mxu0 0
        %624 = vmatpush1.bf16.msra.mxu0 %v605
        %625 = vmatprep.subr.bf16.mxu0 0
        %626 = vmatpush2.bf16.msra.mxu0 0
        %627 = vmatprep.subr.bf16.mxu0 0
        %628 = vmatpush2.bf16.msra.mxu0 0
        %629 = vmatprep.subr.bf16.mxu0 0
        %630 = vmatpush2.bf16.msra.mxu0 0
        %631 = vmatprep.subr.bf16.mxu0 0
        %632 = vmatpush2.bf16.msra.mxu0 0
        %633 = vmatprep.subr.bf16.mxu0 0
        %634 = vmatpush2.bf16.msra.mxu0 0
        %635 = vmatprep.subr.bf16.mxu0 0
        %636 = vmatpush2.bf16.msra.mxu0 0
        %637 = vmatprep.subr.bf16.mxu0 0
        %638 = vmatpush2.bf16.msra.mxu0 0
        %639 = vmatprep.subr.bf16.mxu0 0
        %640 = vmatpush2.bf16.msra.mxu0 0
        %641 = vmatprep.mubr.bf16.mxu0 0
        %642 = vmatmul.mubr.bf16.gmra.mxu0 %v279
        %v643 = vpop.f32.mrf.mxu0
        %v644 = vadd.f32 0.0, %v643
        %v645 = vpop.f32.mrf.mxu0
        %v646 = vpop.f32.mrf.mxu0
        %v647 = vpop.f32.mrf.mxu0
        %648 = vdwg.mxu0
        %v653 = vunpack.c.l.b16 %v489
        %v654 = vunpack.c.l.b16 %v490
        %v655 = vunpack.c.l.b16 %v491
        %v656 = vunpack.c.l.b16 %v492
        %v657 = vpack.c.b16 %v654, %v653
        %v658 = vpack.c.b16 %v656, %v655
        %661 = vmatprep.subr.bf16.mxu0 0
        %662 = vmatpush1.bf16.msra.mxu0 0
        %663 = vmatprep.subr.bf16.mxu0 0
        %664 = vmatpush1.bf16.msra.mxu0 0
        %665 = vmatprep.subr.bf16.mxu0 0
        %666 = vmatpush1.bf16.msra.mxu0 0
        %667 = vmatprep.subr.bf16.mxu0 0
        %668 = vmatpush1.bf16.msra.mxu0 0
        %669 = vmatprep.subr.bf16.mxu0 0
        %670 = vmatpush1.bf16.msra.mxu0 0
        %671 = vmatprep.subr.bf16.mxu0 0
        %672 = vmatpush1.bf16.msra.mxu0 0
        %673 = vmatprep.subr.bf16.mxu0 0
        %674 = vmatpush1.bf16.msra.mxu0 %v658
        %675 = vmatprep.subr.bf16.mxu0 0
        %676 = vmatpush1.bf16.msra.mxu0 %v657
        %677 = vmatprep.subr.bf16.mxu0 0
        %678 = vmatpush2.bf16.msra.mxu0 0
        %679 = vmatprep.subr.bf16.mxu0 0
        %680 = vmatpush2.bf16.msra.mxu0 0
        %681 = vmatprep.subr.bf16.mxu0 0
        %682 = vmatpush2.bf16.msra.mxu0 0
        %683 = vmatprep.subr.bf16.mxu0 0
        %684 = vmatpush2.bf16.msra.mxu0 0
        %685 = vmatprep.subr.bf16.mxu0 0
        %686 = vmatpush2.bf16.msra.mxu0 0
        %687 = vmatprep.subr.bf16.mxu0 0
        %688 = vmatpush2.bf16.msra.mxu0 0
        %689 = vmatprep.subr.bf16.mxu0 0
        %690 = vmatpush2.bf16.msra.mxu0 0
        %691 = vmatprep.subr.bf16.mxu0 0
        %692 = vmatpush2.bf16.msra.mxu0 0
        %693 = vmatprep.mubr.bf16.mxu0 0
        %694 = vmatmul.mubr.bf16.gmra.mxu0 %v279
        %v695 = vpop.f32.mrf.mxu0
        %v696 = vadd.f32 0.0, %v695
        %v697 = vpop.f32.mrf.mxu0
        %v698 = vpop.f32.mrf.mxu0
        %v699 = vpop.f32.mrf.mxu0
        %700 = vdwg.mxu0
        %v701 = vld [vmem:[%s3] sm:$0xf]
        %v702 = vld [vmem:[%s3 + $0x4] sm:$0xf]
        %v703 = vld [vmem:[%s3 + $0x8] sm:$0xf]
        %v704 = vld [vmem:[%s3 + $0xc] sm:$0xf]
        %v705 = vld [vmem:[%s3 + $0x10] sm:$0xf]
        %v706 = vld [vmem:[%s3 + $0x14] sm:$0xf]
        %v707 = vld [vmem:[%s3 + $0x18] sm:$0xf]
        %v708 = vld [vmem:[%s3 + $0x1c] sm:$0xf]
        %v709 = vld [vmem:[%s3 + $0x20] sm:$0xf]
        %v710 = vld [vmem:[%s3 + $0x24] sm:$0xf]
        %v711 = vld [vmem:[%s3 + $0x28] sm:$0xf]
        %v712 = vld [vmem:[%s3 + $0x2c] sm:$0xf]
        %v713 = vld [vmem:[%s3 + $0x30] sm:$0xf]
        %v714 = vld [vmem:[%s3 + $0x34] sm:$0xf]
        %v715 = vld [vmem:[%s3 + $0x38] sm:$0xf]
        %v716 = vld [vmem:[%s3 + $0x3c] sm:$0xf]
        %v721 = vunpack.c.l.b16 %v701
        %v722 = vunpack.c.l.b16 %v702
        %v723 = vunpack.c.l.b16 %v703
        %v724 = vunpack.c.l.b16 %v704
        %v725 = vpack.c.b16 %v722, %v721
        %v726 = vpack.c.b16 %v724, %v723
        %729 = vmatprep.subr.bf16.mxu0 0
        %730 = vmatpush1.bf16.msra.mxu0 0
        %731 = vmatprep.subr.bf16.mxu0 0
        %732 = vmatpush1.bf16.msra.mxu0 0
        %733 = vmatprep.subr.bf16.mxu0 0
        %734 = vmatpush1.bf16.msra.mxu0 0
        %735 = vmatprep.subr.bf16.mxu0 0
        %736 = vmatpush1.bf16.msra.mxu0 0
        %737 = vmatprep.subr.bf16.mxu0 0
        %738 = vmatpush1.bf16.msra.mxu0 0
        %739 = vmatprep.subr.bf16.mxu0 0
        %740 = vmatpush1.bf16.msra.mxu0 0
        %741 = vmatprep.subr.bf16.mxu0 0
        %742 = vmatpush1.bf16.msra.mxu0 %v726
        %743 = vmatprep.subr.bf16.mxu0 0
        %744 = vmatpush1.bf16.msra.mxu0 %v725
        %745 = vmatprep.subr.bf16.mxu0 0
        %746 = vmatpush2.bf16.msra.mxu0 0
        %747 = vmatprep.subr.bf16.mxu0 0
        %748 = vmatpush2.bf16.msra.mxu0 0
        %749 = vmatprep.subr.bf16.mxu0 0
        %750 = vmatpush2.bf16.msra.mxu0 0
        %751 = vmatprep.subr.bf16.mxu0 0
        %752 = vmatpush2.bf16.msra.mxu0 0
        %753 = vmatprep.subr.bf16.mxu0 0
        %754 = vmatpush2.bf16.msra.mxu0 0
        %755 = vmatprep.subr.bf16.mxu0 0
        %756 = vmatpush2.bf16.msra.mxu0 0
        %757 = vmatprep.subr.bf16.mxu0 0
        %758 = vmatpush2.bf16.msra.mxu0 0
        %759 = vmatprep.subr.bf16.mxu0 0
        %760 = vmatpush2.bf16.msra.mxu0 0
        %761 = vmatprep.mubr.bf16.mxu0 0
        %762 = vmatmul.mubr.bf16.gmra.mxu0 %v279
        %v763 = vpop.f32.mrf.mxu0
        %v764 = vadd.f32 0.0, %v763
        %v765 = vpop.f32.mrf.mxu0
        %v766 = vpop.f32.mrf.mxu0
        %v767 = vpop.f32.mrf.mxu0
        %768 = vdwg.mxu0
        %v773 = vunpack.c.l.b16 %v705
        %v774 = vunpack.c.l.b16 %v706
        %v775 = vunpack.c.l.b16 %v707
        %v776 = vunpack.c.l.b16 %v708
        %v777 = vpack.c.b16 %v774, %v773
        %v778 = vpack.c.b16 %v776, %v775
        %781 = vmatprep.subr.bf16.mxu0 0
        %782 = vmatpush1.bf16.msra.mxu0 0
        %783 = vmatprep.subr.bf16.mxu0 0
        %784 = vmatpush1.bf16.msra.mxu0 0
        %785 = vmatprep.subr.bf16.mxu0 0
        %786 = vmatpush1.bf16.msra.mxu0 0
        %787 = vmatprep.subr.bf16.mxu0 0
        %788 = vmatpush1.bf16.msra.mxu0 0
        %789 = vmatprep.subr.bf16.mxu0 0
        %790 = vmatpush1.bf16.msra.mxu0 0
        %791 = vmatprep.subr.bf16.mxu0 0
        %792 = vmatpush1.bf16.msra.mxu0 0
        %793 = vmatprep.subr.bf16.mxu0 0
        %794 = vmatpush1.bf16.msra.mxu0 %v778
        %795 = vmatprep.subr.bf16.mxu0 0
        %796 = vmatpush1.bf16.msra.mxu0 %v777
        %797 = vmatprep.subr.bf16.mxu0 0
        %798 = vmatpush2.bf16.msra.mxu0 0
        %799 = vmatprep.subr.bf16.mxu0 0
        %800 = vmatpush2.bf16.msra.mxu0 0
        %801 = vmatprep.subr.bf16.mxu0 0
        %802 = vmatpush2.bf16.msra.mxu0 0
        %803 = vmatprep.subr.bf16.mxu0 0
        %804 = vmatpush2.bf16.msra.mxu0 0
        %805 = vmatprep.subr.bf16.mxu0 0
        %806 = vmatpush2.bf16.msra.mxu0 0
        %807 = vmatprep.subr.bf16.mxu0 0
        %808 = vmatpush2.bf16.msra.mxu0 0
        %809 = vmatprep.subr.bf16.mxu0 0
        %810 = vmatpush2.bf16.msra.mxu0 0
        %811 = vmatprep.subr.bf16.mxu0 0
        %812 = vmatpush2.bf16.msra.mxu0 0
        %813 = vmatprep.mubr.bf16.mxu0 0
        %814 = vmatmul.mubr.bf16.gmra.mxu0 %v279
        %v815 = vpop.f32.mrf.mxu0
        %v816 = vadd.f32 0.0, %v815
        %v817 = vpop.f32.mrf.mxu0
        %v818 = vpop.f32.mrf.mxu0
        %v819 = vpop.f32.mrf.mxu0
        %820 = vdwg.mxu0
        %v825 = vunpack.c.l.b16 %v709
        %v826 = vunpack.c.l.b16 %v710
        %v827 = vunpack.c.l.b16 %v711
        %v828 = vunpack.c.l.b16 %v712
        %v829 = vpack.c.b16 %v826, %v825
        %v830 = vpack.c.b16 %v828, %v827
        %833 = vmatprep.subr.bf16.mxu0 0
        %834 = vmatpush1.bf16.msra.mxu0 0
        %835 = vmatprep.subr.bf16.mxu0 0
        %836 = vmatpush1.bf16.msra.mxu0 0
        %837 = vmatprep.subr.bf16.mxu0 0
        %838 = vmatpush1.bf16.msra.mxu0 0
        %839 = vmatprep.subr.bf16.mxu0 0
        %840 = vmatpush1.bf16.msra.mxu0 0
        %841 = vmatprep.subr.bf16.mxu0 0
        %842 = vmatpush1.bf16.msra.mxu0 0
        %843 = vmatprep.subr.bf16.mxu0 0
        %844 = vmatpush1.bf16.msra.mxu0 0
        %845 = vmatprep.subr.bf16.mxu0 0
        %846 = vmatpush1.bf16.msra.mxu0 %v830
        %847 = vmatprep.subr.bf16.mxu0 0
        %848 = vmatpush1.bf16.msra.mxu0 %v829
        %849 = vmatprep.subr.bf16.mxu0 0
        %850 = vmatpush2.bf16.msra.mxu0 0
        %851 = vmatprep.subr.bf16.mxu0 0
        %852 = vmatpush2.bf16.msra.mxu0 0
        %853 = vmatprep.subr.bf16.mxu0 0
        %854 = vmatpush2.bf16.msra.mxu0 0
        %855 = vmatprep.subr.bf16.mxu0 0
        %856 = vmatpush2.bf16.msra.mxu0 0
        %857 = vmatprep.subr.bf16.mxu0 0
        %858 = vmatpush2.bf16.msra.mxu0 0
        %859 = vmatprep.subr.bf16.mxu0 0
        %860 = vmatpush2.bf16.msra.mxu0 0
        %861 = vmatprep.subr.bf16.mxu0 0
        %862 = vmatpush2.bf16.msra.mxu0 0
        %863 = vmatprep.subr.bf16.mxu0 0
        %864 = vmatpush2.bf16.msra.mxu0 0
        %865 = vmatprep.mubr.bf16.mxu0 0
        %866 = vmatmul.mubr.bf16.gmra.mxu0 %v279
        %v867 = vpop.f32.mrf.mxu0
        %v868 = vadd.f32 0.0, %v867
        %v869 = vpop.f32.mrf.mxu0
        %v870 = vpop.f32.mrf.mxu0
        %v871 = vpop.f32.mrf.mxu0
        %872 = vdwg.mxu0
        %v877 = vunpack.c.l.b16 %v713
        %v878 = vunpack.c.l.b16 %v714
        %v879 = vunpack.c.l.b16 %v715
        %v880 = vunpack.c.l.b16 %v716
        %v881 = vpack.c.b16 %v878, %v877
        %v882 = vpack.c.b16 %v880, %v879
        %885 = vmatprep.subr.bf16.mxu0 0
        %886 = vmatpush1.bf16.msra.mxu0 0
        %887 = vmatprep.subr.bf16.mxu0 0
        %888 = vmatpush1.bf16.msra.mxu0 0
        %889 = vmatprep.subr.bf16.mxu0 0
        %890 = vmatpush1.bf16.msra.mxu0 0
        %891 = vmatprep.subr.bf16.mxu0 0
        %892 = vmatpush1.bf16.msra.mxu0 0
        %893 = vmatprep.subr.bf16.mxu0 0
        %894 = vmatpush1.bf16.msra.mxu0 0
        %895 = vmatprep.subr.bf16.mxu0 0
        %896 = vmatpush1.bf16.msra.mxu0 0
        %897 = vmatprep.subr.bf16.mxu0 0
        %898 = vmatpush1.bf16.msra.mxu0 %v882
        %899 = vmatprep.subr.bf16.mxu0 0
        %900 = vmatpush1.bf16.msra.mxu0 %v881
        %901 = vmatprep.subr.bf16.mxu0 0
        %902 = vmatpush2.bf16.msra.mxu0 0
        %903 = vmatprep.subr.bf16.mxu0 0
        %904 = vmatpush2.bf16.msra.mxu0 0
        %905 = vmatprep.subr.bf16.mxu0 0
        %906 = vmatpush2.bf16.msra.mxu0 0
        %907 = vmatprep.subr.bf16.mxu0 0
        %908 = vmatpush2.bf16.msra.mxu0 0
        %909 = vmatprep.subr.bf16.mxu0 0
        %910 = vmatpush2.bf16.msra.mxu0 0
        %911 = vmatprep.subr.bf16.mxu0 0
        %912 = vmatpush2.bf16.msra.mxu0 0
        %913 = vmatprep.subr.bf16.mxu0 0
        %914 = vmatpush2.bf16.msra.mxu0 0
        %915 = vmatprep.subr.bf16.mxu0 0
        %916 = vmatpush2.bf16.msra.mxu0 0
        %917 = vmatprep.mubr.bf16.mxu0 0
        %918 = vmatmul.mubr.bf16.gmra.mxu0 %v279
        %v919 = vpop.f32.mrf.mxu0
        %v920 = vadd.f32 0.0, %v919
        %v921 = vpop.f32.mrf.mxu0
        %v922 = vpop.f32.mrf.mxu0
        %v923 = vpop.f32.mrf.mxu0
        %924 = vdwg.mxu0
        %v925 = vpack.c.bf16 %v316, %v316
        %v926 = vpack.c.bf16 %v368, %v368
        %v927 = vpack.c.bf16 %v420, %v420
        %v928 = vpack.c.bf16 %v472, %v472
        %v929 = vpack.c.bf16 %v540, %v540
        %v930 = vpack.c.bf16 %v592, %v592
        %v931 = vpack.c.bf16 %v644, %v644
        %v932 = vpack.c.bf16 %v696, %v696
        %vm933 = vcmask 64512
        %v935 = vsel %vm933, %v925, 0
        %v938 = vsel %vm933, %v929, 0
        %940 = vmatprep.subr.bf16.mxu0 0
        %941 = vmatpush1.bf16.xpose.msra.mxu0 0
        %942 = vmatprep.subr.bf16.mxu0 0
        %943 = vmatpush1.bf16.xpose.msra.mxu0 0
        %944 = vmatprep.subr.bf16.mxu0 0
        %945 = vmatpush1.bf16.xpose.msra.mxu0 0
        %946 = vmatprep.subr.bf16.mxu0 0
        %947 = vmatpush1.bf16.xpose.msra.mxu0 0
        %948 = vmatprep.subr.bf16.mxu0 0
        %949 = vmatpush1.bf16.xpose.msra.mxu0 0
        %950 = vmatprep.subr.bf16.mxu0 0
        %951 = vmatpush1.bf16.xpose.msra.mxu0 0
        %952 = vmatprep.subr.bf16.mxu0 0
        %953 = vmatpush1.bf16.xpose.msra.mxu0 0
        %954 = vmatprep.subr.bf16.mxu0 0
        %955 = vmatpush1.bf16.xpose.msra.mxu0 %v938
        %956 = vmatprep.subr.bf16.mxu0 0
        %957 = vmatpush2.bf16.xpose.msra.mxu0 0
        %958 = vmatprep.subr.bf16.mxu0 0
        %959 = vmatpush2.bf16.xpose.msra.mxu0 0
        %960 = vmatprep.subr.bf16.mxu0 0
        %961 = vmatpush2.bf16.xpose.msra.mxu0 0
        %962 = vmatprep.subr.bf16.mxu0 0
        %963 = vmatpush2.bf16.xpose.msra.mxu0 0
        %964 = vmatprep.subr.bf16.mxu0 0
        %965 = vmatpush2.bf16.xpose.msra.mxu0 0
        %966 = vmatprep.subr.bf16.mxu0 0
        %967 = vmatpush2.bf16.xpose.msra.mxu0 0
        %968 = vmatprep.subr.bf16.mxu0 0
        %969 = vmatpush2.bf16.xpose.msra.mxu0 0
        %970 = vmatprep.subr.bf16.mxu0 0
        %971 = vmatpush2.bf16.xpose.msra.mxu0 0
        %972 = vmatprep.mubr.bf16.mxu0 0
        %973 = vmatmul.mubr.bf16.gmra.mxu0 %v935
        %v974 = vpop.f32.mrf.mxu0
        %v975 = vadd.f32 0.0, %v974
        %v976 = vpop.f32.mrf.mxu0
        %v977 = vpop.f32.mrf.mxu0
        %v978 = vpop.f32.mrf.mxu0
        %979 = vdwg.mxu0
        %v981 = vsel %vm933, %v926, 0
        %v984 = vsel %vm933, %v930, 0
        %986 = vmatprep.subr.bf16.mxu0 0
        %987 = vmatpush1.bf16.xpose.msra.mxu0 0
        %988 = vmatprep.subr.bf16.mxu0 0
        %989 = vmatpush1.bf16.xpose.msra.mxu0 0
        %990 = vmatprep.subr.bf16.mxu0 0
        %991 = vmatpush1.bf16.xpose.msra.mxu0 0
        %992 = vmatprep.subr.bf16.mxu0 0
        %993 = vmatpush1.bf16.xpose.msra.mxu0 0
        %994 = vmatprep.subr.bf16.mxu0 0
        %995 = vmatpush1.bf16.xpose.msra.mxu0 0
        %996 = vmatprep.subr.bf16.mxu0 0
        %997 = vmatpush1.bf16.xpose.msra.mxu0 0
        %998 = vmatprep.subr.bf16.mxu0 0
        %999 = vmatpush1.bf16.xpose.msra.mxu0 0
        %1000 = vmatprep.subr.bf16.mxu0 0
        %1001 = vmatpush1.bf16.xpose.msra.mxu0 %v984
        %1002 = vmatprep.subr.bf16.mxu0 0
        %1003 = vmatpush2.bf16.xpose.msra.mxu0 0
        %1004 = vmatprep.subr.bf16.mxu0 0
        %1005 = vmatpush2.bf16.xpose.msra.mxu0 0
        %1006 = vmatprep.subr.bf16.mxu0 0
        %1007 = vmatpush2.bf16.xpose.msra.mxu0 0
        %1008 = vmatprep.subr.bf16.mxu0 0
        %1009 = vmatpush2.bf16.xpose.msra.mxu0 0
        %1010 = vmatprep.subr.bf16.mxu0 0
        %1011 = vmatpush2.bf16.xpose.msra.mxu0 0
        %1012 = vmatprep.subr.bf16.mxu0 0
        %1013 = vmatpush2.bf16.xpose.msra.mxu0 0
        %1014 = vmatprep.subr.bf16.mxu0 0
        %1015 = vmatpush2.bf16.xpose.msra.mxu0 0
        %1016 = vmatprep.subr.bf16.mxu0 0
        %1017 = vmatpush2.bf16.xpose.msra.mxu0 0
        %1018 = vmatprep.mubr.bf16.mxu0 0
        %1019 = vmatmul.mubr.bf16.gmra.mxu0 %v981
        %v1020 = vpop.f32.mrf.mxu0
        %v1021 = vadd.f32 0.0, %v1020
        %v1022 = vpop.f32.mrf.mxu0
        %v1023 = vpop.f32.mrf.mxu0
        %v1024 = vpop.f32.mrf.mxu0
        %1025 = vdwg.mxu0
        %v1027 = vsel %vm933, %v927, 0
        %v1030 = vsel %vm933, %v931, 0
        %1032 = vmatprep.subr.bf16.mxu0 0
        %1033 = vmatpush1.bf16.xpose.msra.mxu0 0
        %1034 = vmatprep.subr.bf16.mxu0 0
        %1035 = vmatpush1.bf16.xpose.msra.mxu0 0
        %1036 = vmatprep.subr.bf16.mxu0 0
        %1037 = vmatpush1.bf16.xpose.msra.mxu0 0
        %1038 = vmatprep.subr.bf16.mxu0 0
        %1039 = vmatpush1.bf16.xpose.msra.mxu0 0
        %1040 = vmatprep.subr.bf16.mxu0 0
        %1041 = vmatpush1.bf16.xpose.msra.mxu0 0
        %1042 = vmatprep.subr.bf16.mxu0 0
        %1043 = vmatpush1.bf16.xpose.msra.mxu0 0
        %1044 = vmatprep.subr.bf16.mxu0 0
        %1045 = vmatpush1.bf16.xpose.msra.mxu0 0
        %1046 = vmatprep.subr.bf16.mxu0 0
        %1047 = vmatpush1.bf16.xpose.msra.mxu0 %v1030
        %1048 = vmatprep.subr.bf16.mxu0 0
        %1049 = vmatpush2.bf16.xpose.msra.mxu0 0
        %1050 = vmatprep.subr.bf16.mxu0 0
        %1051 = vmatpush2.bf16.xpose.msra.mxu0 0
        %1052 = vmatprep.subr.bf16.mxu0 0
        %1053 = vmatpush2.bf16.xpose.msra.mxu0 0
        %1054 = vmatprep.subr.bf16.mxu0 0
        %1055 = vmatpush2.bf16.xpose.msra.mxu0 0
        %1056 = vmatprep.subr.bf16.mxu0 0
        %1057 = vmatpush2.bf16.xpose.msra.mxu0 0
        %1058 = vmatprep.subr.bf16.mxu0 0
        %1059 = vmatpush2.bf16.xpose.msra.mxu0 0
        %1060 = vmatprep.subr.bf16.mxu0 0
        %1061 = vmatpush2.bf16.xpose.msra.mxu0 0
        %1062 = vmatprep.subr.bf16.mxu0 0
        %1063 = vmatpush2.bf16.xpose.msra.mxu0 0
        %1064 = vmatprep.mubr.bf16.mxu0 0
        %1065 = vmatmul.mubr.bf16.gmra.mxu0 %v1027
        %v1066 = vpop.f32.mrf.mxu0
        %v1067 = vadd.f32 0.0, %v1066
        %v1068 = vpop.f32.mrf.mxu0
        %v1069 = vpop.f32.mrf.mxu0
        %v1070 = vpop.f32.mrf.mxu0
        %1071 = vdwg.mxu0
        %v1073 = vsel %vm933, %v928, 0
        %v1076 = vsel %vm933, %v932, 0
        %1078 = vmatprep.subr.bf16.mxu0 0
        %1079 = vmatpush1.bf16.xpose.msra.mxu0 0
        %1080 = vmatprep.subr.bf16.mxu0 0
        %1081 = vmatpush1.bf16.xpose.msra.mxu0 0
        %1082 = vmatprep.subr.bf16.mxu0 0
        %1083 = vmatpush1.bf16.xpose.msra.mxu0 0
        %1084 = vmatprep.subr.bf16.mxu0 0
        %1085 = vmatpush1.bf16.xpose.msra.mxu0 0
        %1086 = vmatprep.subr.bf16.mxu0 0
        %1087 = vmatpush1.bf16.xpose.msra.mxu0 0
        %1088 = vmatprep.subr.bf16.mxu0 0
        %1089 = vmatpush1.bf16.xpose.msra.mxu0 0
        %1090 = vmatprep.subr.bf16.mxu0 0
        %1091 = vmatpush1.bf16.xpose.msra.mxu0 0
        %1092 = vmatprep.subr.bf16.mxu0 0
        %1093 = vmatpush1.bf16.xpose.msra.mxu0 %v1076
        %1094 = vmatprep.subr.bf16.mxu0 0
        %1095 = vmatpush2.bf16.xpose.msra.mxu0 0
        %1096 = vmatprep.subr.bf16.mxu0 0
        %1097 = vmatpush2.bf16.xpose.msra.mxu0 0
        %1098 = vmatprep.subr.bf16.mxu0 0
        %1099 = vmatpush2.bf16.xpose.msra.mxu0 0
        %1100 = vmatprep.subr.bf16.mxu0 0
        %1101 = vmatpush2.bf16.xpose.msra.mxu0 0
        %1102 = vmatprep.subr.bf16.mxu0 0
        %1103 = vmatpush2.bf16.xpose.msra.mxu0 0
        %1104 = vmatprep.subr.bf16.mxu0 0
        %1105 = vmatpush2.bf16.xpose.msra.mxu0 0
        %1106 = vmatprep.subr.bf16.mxu0 0
        %1107 = vmatpush2.bf16.xpose.msra.mxu0 0
        %1108 = vmatprep.subr.bf16.mxu0 0
        %1109 = vmatpush2.bf16.xpose.msra.mxu0 0
        %1110 = vmatprep.mubr.bf16.mxu0 0
        %1111 = vmatmul.mubr.bf16.gmra.mxu0 %v1073
        %v1112 = vpop.f32.mrf.mxu0
        %v1113 = vadd.f32 0.0, %v1112
        %v1114 = vpop.f32.mrf.mxu0
        %v1115 = vpop.f32.mrf.mxu0
        %v1116 = vpop.f32.mrf.mxu0
        %1117 = vdwg.mxu0
        %v1118 = vsel %vm933, %v975, -inf
        %1119 = vmax.xlane.f32.xlu0 %v1118
        %v1120 = vpop.xlane.xlu0 %1119
        %v1121 = vsel %vm933, %v1021, -inf
        %1122 = vmax.xlane.f32.xlu0 %v1121
        %v1123 = vpop.xlane.xlu0 %1122
        %v1124 = vsel %vm933, %v1067, -inf
        %1125 = vmax.xlane.f32.xlu0 %v1124
        %v1126 = vpop.xlane.xlu0 %1125
        %v1127 = vsel %vm933, %v1113, -inf
        %1128 = vmax.xlane.f32.xlu0 %v1127
        %v1129 = vpop.xlane.xlu0 %1128
        %v1130 = vsub.f32 %v975, %v1120
        %v1131 = vsub.f32 %v1021, %v1123
        %v1132 = vsub.f32 %v1067, %v1126
        %v1133 = vsub.f32 %v1113, %v1129
        %v1134 = vmul.f32 %v1130, 1.442695
        %v1135 = vpow.pop %v1134
        %v1136 = vmul.f32 %v1131, 1.442695
        %v1137 = vpow.pop %v1136
        %v1138 = vmul.f32 %v1132, 1.442695
        %v1139 = vpow.pop %v1138
        %v1140 = vmul.f32 %v1133, 1.442695
        %v1141 = vpow.pop %v1140
        %v1142 = vsel %vm933, %v1135, 0.0
        %1143 = vadd.xlane.f32.xlu0 %v1142
        %v1144 = vpop.xlane.xlu0 %1143
        %v1145 = vsel %vm933, %v1137, 0.0
        %1146 = vadd.xlane.f32.xlu0 %v1145
        %v1147 = vpop.xlane.xlu0 %1146
        %v1148 = vsel %vm933, %v1139, 0.0
        %1149 = vadd.xlane.f32.xlu0 %v1148
        %v1150 = vpop.xlane.xlu0 %1149
        %v1151 = vsel %vm933, %v1141, 0.0
        %1152 = vadd.xlane.f32.xlu0 %v1151
        %v1153 = vpop.xlane.xlu0 %1152
        %v1154 = vrcp.pop %v1144
        %v1155 = vrcp.pop %v1147
        %v1156 = vrcp.pop %v1150
        %v1157 = vrcp.pop %v1153
        %v1158 = vmul.f32 %v1135, %v1154
        %v1159 = vmul.f32 %v1137, %v1155
        %v1160 = vmul.f32 %v1139, %v1156
        %v1161 = vmul.f32 %v1141, %v1157
        %v1162 = vpack.c.bf16 %v1158, %v1158
        %v1163 = vpack.c.bf16 %v1159, %v1159
        %v1164 = vpack.c.bf16 %v1160, %v1160
        %v1165 = vpack.c.bf16 %v1161, %v1161
        %v1166 = vpack.c.bf16 %v764, %v764
        %v1167 = vpack.c.bf16 %v816, %v816
        %v1168 = vpack.c.bf16 %v868, %v868
        %v1169 = vpack.c.bf16 %v920, %v920
        %v1171 = vsel %vm933, %v1162, 0
        %vm1173 = vcmask 1043456
        %v1175 = vsel %vm1173, %v1166, 0
        %1177 = vmatprep.subr.bf16.mxu0 0
        %1178 = vmatpush1.bf16.msra.mxu0 0
        %1179 = vmatprep.subr.bf16.mxu0 0
        %1180 = vmatpush1.bf16.msra.mxu0 0
        %1181 = vmatprep.subr.bf16.mxu0 0
        %1182 = vmatpush1.bf16.msra.mxu0 0
        %1183 = vmatprep.subr.bf16.mxu0 0
        %1184 = vmatpush1.bf16.msra.mxu0 0
        %1185 = vmatprep.subr.bf16.mxu0 0
        %1186 = vmatpush1.bf16.msra.mxu0 0
        %1187 = vmatprep.subr.bf16.mxu0 0
        %1188 = vmatpush1.bf16.msra.mxu0 0
        %1189 = vmatprep.subr.bf16.mxu0 0
        %1190 = vmatpush1.bf16.msra.mxu0 0
        %1191 = vmatprep.subr.bf16.mxu0 0
        %1192 = vmatpush1.bf16.msra.mxu0 %v1175
        %1193 = vmatprep.subr.bf16.mxu0 0
        %1194 = vmatpush2.bf16.msra.mxu0 0
        %1195 = vmatprep.subr.bf16.mxu0 0
        %1196 = vmatpush2.bf16.msra.mxu0 0
        %1197 = vmatprep.subr.bf16.mxu0 0
        %1198 = vmatpush2.bf16.msra.mxu0 0
        %1199 = vmatprep.subr.bf16.mxu0 0
        %1200 = vmatpush2.bf16.msra.mxu0 0
        %1201 = vmatprep.subr.bf16.mxu0 0
        %1202 = vmatpush2.bf16.msra.mxu0 0
        %1203 = vmatprep.subr.bf16.mxu0 0
        %1204 = vmatpush2.bf16.msra.mxu0 0
        %1205 = vmatprep.subr.bf16.mxu0 0
        %1206 = vmatpush2.bf16.msra.mxu0 0
        %1207 = vmatprep.subr.bf16.mxu0 0
        %1208 = vmatpush2.bf16.msra.mxu0 0
        %1209 = vmatprep.mubr.bf16.mxu0 0
        %1210 = vmatmul.mubr.bf16.gmra.mxu0 %v1171
        %v1211 = vpop.f32.mrf.mxu0
        %v1212 = vadd.f32 0.0, %v1211
        %v1213 = vpop.f32.mrf.mxu0
        %v1214 = vpop.f32.mrf.mxu0
        %v1215 = vpop.f32.mrf.mxu0
        %1216 = vdwg.mxu0
        %v1218 = vsel %vm933, %v1163, 0
        %v1221 = vsel %vm1173, %v1167, 0
        %1223 = vmatprep.subr.bf16.mxu0 0
        %1224 = vmatpush1.bf16.msra.mxu0 0
        %1225 = vmatprep.subr.bf16.mxu0 0
        %1226 = vmatpush1.bf16.msra.mxu0 0
        %1227 = vmatprep.subr.bf16.mxu0 0
        %1228 = vmatpush1.bf16.msra.mxu0 0
        %1229 = vmatprep.subr.bf16.mxu0 0
        %1230 = vmatpush1.bf16.msra.mxu0 0
        %1231 = vmatprep.subr.bf16.mxu0 0
        %1232 = vmatpush1.bf16.msra.mxu0 0
        %1233 = vmatprep.subr.bf16.mxu0 0
        %1234 = vmatpush1.bf16.msra.mxu0 0
        %1235 = vmatprep.subr.bf16.mxu0 0
        %1236 = vmatpush1.bf16.msra.mxu0 0
        %1237 = vmatprep.subr.bf16.mxu0 0
        %1238 = vmatpush1.bf16.msra.mxu0 %v1221
        %1239 = vmatprep.subr.bf16.mxu0 0
        %1240 = vmatpush2.bf16.msra.mxu0 0
        %1241 = vmatprep.subr.bf16.mxu0 0
        %1242 = vmatpush2.bf16.msra.mxu0 0
        %1243 = vmatprep.subr.bf16.mxu0 0
        %1244 = vmatpush2.bf16.msra.mxu0 0
        %1245 = vmatprep.subr.bf16.mxu0 0
        %1246 = vmatpush2.bf16.msra.mxu0 0
        %1247 = vmatprep.subr.bf16.mxu0 0
        %1248 = vmatpush2.bf16.msra.mxu0 0
        %1249 = vmatprep.subr.bf16.mxu0 0
        %1250 = vmatpush2.bf16.msra.mxu0 0
        %1251 = vmatprep.subr.bf16.mxu0 0
        %1252 = vmatpush2.bf16.msra.mxu0 0
        %1253 = vmatprep.subr.bf16.mxu0 0
        %1254 = vmatpush2.bf16.msra.mxu0 0
        %1255 = vmatprep.mubr.bf16.mxu0 0
        %1256 = vmatmul.mubr.bf16.gmra.mxu0 %v1218
        %v1257 = vpop.f32.mrf.mxu0
        %v1258 = vadd.f32 0.0, %v1257
        %v1259 = vpop.f32.mrf.mxu0
        %v1260 = vpop.f32.mrf.mxu0
        %v1261 = vpop.f32.mrf.mxu0
        %1262 = vdwg.mxu0
        %v1264 = vsel %vm933, %v1164, 0
        %v1267 = vsel %vm1173, %v1168, 0
        %1269 = vmatprep.subr.bf16.mxu0 0
        %1270 = vmatpush1.bf16.msra.mxu0 0
        %1271 = vmatprep.subr.bf16.mxu0 0
        %1272 = vmatpush1.bf16.msra.mxu0 0
        %1273 = vmatprep.subr.bf16.mxu0 0
        %1274 = vmatpush1.bf16.msra.mxu0 0
        %1275 = vmatprep.subr.bf16.mxu0 0
        %1276 = vmatpush1.bf16.msra.mxu0 0
        %1277 = vmatprep.subr.bf16.mxu0 0
        %1278 = vmatpush1.bf16.msra.mxu0 0
        %1279 = vmatprep.subr.bf16.mxu0 0
        %1280 = vmatpush1.bf16.msra.mxu0 0
        %1281 = vmatprep.subr.bf16.mxu0 0
        %1282 = vmatpush1.bf16.msra.mxu0 0
        %1283 = vmatprep.subr.bf16.mxu0 0
        %1284 = vmatpush1.bf16.msra.mxu0 %v1267
        %1285 = vmatprep.subr.bf16.mxu0 0
        %1286 = vmatpush2.bf16.msra.mxu0 0
        %1287 = vmatprep.subr.bf16.mxu0 0
        %1288 = vmatpush2.bf16.msra.mxu0 0
        %1289 = vmatprep.subr.bf16.mxu0 0
        %1290 = vmatpush2.bf16.msra.mxu0 0
        %1291 = vmatprep.subr.bf16.mxu0 0
        %1292 = vmatpush2.bf16.msra.mxu0 0
        %1293 = vmatprep.subr.bf16.mxu0 0
        %1294 = vmatpush2.bf16.msra.mxu0 0
        %1295 = vmatprep.subr.bf16.mxu0 0
        %1296 = vmatpush2.bf16.msra.mxu0 0
        %1297 = vmatprep.subr.bf16.mxu0 0
        %1298 = vmatpush2.bf16.msra.mxu0 0
        %1299 = vmatprep.subr.bf16.mxu0 0
        %1300 = vmatpush2.bf16.msra.mxu0 0
        %1301 = vmatprep.mubr.bf16.mxu0 0
        %1302 = vmatmul.mubr.bf16.gmra.mxu0 %v1264
        %v1303 = vpop.f32.mrf.mxu0
        %v1304 = vadd.f32 0.0, %v1303
        %v1305 = vpop.f32.mrf.mxu0
        %v1306 = vpop.f32.mrf.mxu0
        %v1307 = vpop.f32.mrf.mxu0
        %1308 = vdwg.mxu0
        %v1310 = vsel %vm933, %v1165, 0
        %v1313 = vsel %vm1173, %v1169, 0
        %1315 = vmatprep.subr.bf16.mxu0 0
        %1316 = vmatpush1.bf16.msra.mxu0 0
        %1317 = vmatprep.subr.bf16.mxu0 0
        %1318 = vmatpush1.bf16.msra.mxu0 0
        %1319 = vmatprep.subr.bf16.mxu0 0
        %1320 = vmatpush1.bf16.msra.mxu0 0
        %1321 = vmatprep.subr.bf16.mxu0 0
        %1322 = vmatpush1.bf16.msra.mxu0 0
        %1323 = vmatprep.subr.bf16.mxu0 0
        %1324 = vmatpush1.bf16.msra.mxu0 0
        %1325 = vmatprep.subr.bf16.mxu0 0
        %1326 = vmatpush1.bf16.msra.mxu0 0
        %1327 = vmatprep.subr.bf16.mxu0 0
        %1328 = vmatpush1.bf16.msra.mxu0 0
        %1329 = vmatprep.subr.bf16.mxu0 0
        %1330 = vmatpush1.bf16.msra.mxu0 %v1313
        %1331 = vmatprep.subr.bf16.mxu0 0
        %1332 = vmatpush2.bf16.msra.mxu0 0
        %1333 = vmatprep.subr.bf16.mxu0 0
        %1334 = vmatpush2.bf16.msra.mxu0 0
        %1335 = vmatprep.subr.bf16.mxu0 0
        %1336 = vmatpush2.bf16.msra.mxu0 0
        %1337 = vmatprep.subr.bf16.mxu0 0
        %1338 = vmatpush2.bf16.msra.mxu0 0
        %1339 = vmatprep.subr.bf16.mxu0 0
        %1340 = vmatpush2.bf16.msra.mxu0 0
        %1341 = vmatprep.subr.bf16.mxu0 0
        %1342 = vmatpush2.bf16.msra.mxu0 0
        %1343 = vmatprep.subr.bf16.mxu0 0
        %1344 = vmatpush2.bf16.msra.mxu0 0
        %1345 = vmatprep.subr.bf16.mxu0 0
        %1346 = vmatpush2.bf16.msra.mxu0 0
        %1347 = vmatprep.mubr.bf16.mxu0 0
        %1348 = vmatmul.mubr.bf16.gmra.mxu0 %v1310
        %v1349 = vpop.f32.mrf.mxu0
        %v1350 = vadd.f32 0.0, %v1349
        %v1351 = vpop.f32.mrf.mxu0
        %v1352 = vpop.f32.mrf.mxu0
        %v1353 = vpop.f32.mrf.mxu0
        %1354 = vdwg.mxu0
        %v1355 = vpack.c.bf16 %v1212, %v1212
        %v1356 = vpack.c.bf16 %v1258, %v1258
        %v1357 = vpack.c.bf16 %v1304, %v1304
        %v1358 = vpack.c.bf16 %v1350, %v1350
        %v1359 = vld [vmem:[%s4] sm:$0xf]
        %v1360 = vld [vmem:[%s4 + $0x4] sm:$0xf]
        %v1361 = vld [vmem:[%s4 + $0x8] sm:$0xf]
        %v1362 = vld [vmem:[%s4 + $0xc] sm:$0xf]
        %v1364 = vsel %vm933, %v1355, 0
        %v1367 = vsel %vm1173, %v1359, 0
        %1369 = vmatprep.subr.bf16.mxu0 0
        %1370 = vmatpush1.bf16.msra.mxu0 0
        %1371 = vmatprep.subr.bf16.mxu0 0
        %1372 = vmatpush1.bf16.msra.mxu0 0
        %1373 = vmatprep.subr.bf16.mxu0 0
        %1374 = vmatpush1.bf16.msra.mxu0 0
        %1375 = vmatprep.subr.bf16.mxu0 0
        %1376 = vmatpush1.bf16.msra.mxu0 0
        %1377 = vmatprep.subr.bf16.mxu0 0
        %1378 = vmatpush1.bf16.msra.mxu0 0
        %1379 = vmatprep.subr.bf16.mxu0 0
        %1380 = vmatpush1.bf16.msra.mxu0 0
        %1381 = vmatprep.subr.bf16.mxu0 0
        %1382 = vmatpush1.bf16.msra.mxu0 0
        %1383 = vmatprep.subr.bf16.mxu0 0
        %1384 = vmatpush1.bf16.msra.mxu0 %v1367
        %1385 = vmatprep.subr.bf16.mxu0 0
        %1386 = vmatpush2.bf16.msra.mxu0 0
        %1387 = vmatprep.subr.bf16.mxu0 0
        %1388 = vmatpush2.bf16.msra.mxu0 0
        %1389 = vmatprep.subr.bf16.mxu0 0
        %1390 = vmatpush2.bf16.msra.mxu0 0
        %1391 = vmatprep.subr.bf16.mxu0 0
        %1392 = vmatpush2.bf16.msra.mxu0 0
        %1393 = vmatprep.subr.bf16.mxu0 0
        %1394 = vmatpush2.bf16.msra.mxu0 0
        %1395 = vmatprep.subr.bf16.mxu0 0
        %1396 = vmatpush2.bf16.msra.mxu0 0
        %1397 = vmatprep.subr.bf16.mxu0 0
        %1398 = vmatpush2.bf16.msra.mxu0 0
        %1399 = vmatprep.subr.bf16.mxu0 0
        %1400 = vmatpush2.bf16.msra.mxu0 0
        %1401 = vmatprep.mubr.bf16.mxu0 0
        %1402 = vmatmul.mubr.bf16.gmra.mxu0 %v1364
        %v1403 = vpop.f32.mrf.mxu0
        %v1404 = vadd.f32 0.0, %v1403
        %v1405 = vpop.f32.mrf.mxu0
        %v1406 = vpop.f32.mrf.mxu0
        %v1407 = vpop.f32.mrf.mxu0
        %1408 = vdwg.mxu0
        %v1410 = vsel %vm933, %v1356, 0
        %v1413 = vsel %vm1173, %v1360, 0
        %1415 = vmatprep.subr.bf16.mxu0 0
        %1416 = vmatpush1.bf16.msra.mxu0 0
        %1417 = vmatprep.subr.bf16.mxu0 0
        %1418 = vmatpush1.bf16.msra.mxu0 0
        %1419 = vmatprep.subr.bf16.mxu0 0
        %1420 = vmatpush1.bf16.msra.mxu0 0
        %1421 = vmatprep.subr.bf16.mxu0 0
        %1422 = vmatpush1.bf16.msra.mxu0 0
        %1423 = vmatprep.subr.bf16.mxu0 0
        %1424 = vmatpush1.bf16.msra.mxu0 0
        %1425 = vmatprep.subr.bf16.mxu0 0
        %1426 = vmatpush1.bf16.msra.mxu0 0
        %1427 = vmatprep.subr.bf16.mxu0 0
        %1428 = vmatpush1.bf16.msra.mxu0 0
        %1429 = vmatprep.subr.bf16.mxu0 0
        %1430 = vmatpush1.bf16.msra.mxu0 %v1413
        %1431 = vmatprep.subr.bf16.mxu0 0
        %1432 = vmatpush2.bf16.msra.mxu0 0
        %1433 = vmatprep.subr.bf16.mxu0 0
        %1434 = vmatpush2.bf16.msra.mxu0 0
        %1435 = vmatprep.subr.bf16.mxu0 0
        %1436 = vmatpush2.bf16.msra.mxu0 0
        %1437 = vmatprep.subr.bf16.mxu0 0
        %1438 = vmatpush2.bf16.msra.mxu0 0
        %1439 = vmatprep.subr.bf16.mxu0 0
        %1440 = vmatpush2.bf16.msra.mxu0 0
        %1441 = vmatprep.subr.bf16.mxu0 0
        %1442 = vmatpush2.bf16.msra.mxu0 0
        %1443 = vmatprep.subr.bf16.mxu0 0
        %1444 = vmatpush2.bf16.msra.mxu0 0
        %1445 = vmatprep.subr.bf16.mxu0 0
        %1446 = vmatpush2.bf16.msra.mxu0 0
        %1447 = vmatprep.mubr.bf16.mxu0 0
        %1448 = vmatmul.mubr.bf16.gmra.mxu0 %v1410
        %v1449 = vpop.f32.mrf.mxu0
        %v1450 = vadd.f32 0.0, %v1449
        %v1451 = vpop.f32.mrf.mxu0
        %v1452 = vpop.f32.mrf.mxu0
        %v1453 = vpop.f32.mrf.mxu0
        %1454 = vdwg.mxu0
        %v1456 = vsel %vm933, %v1357, 0
        %v1459 = vsel %vm1173, %v1361, 0
        %1461 = vmatprep.subr.bf16.mxu0 0
        %1462 = vmatpush1.bf16.msra.mxu0 0
        %1463 = vmatprep.subr.bf16.mxu0 0
        %1464 = vmatpush1.bf16.msra.mxu0 0
        %1465 = vmatprep.subr.bf16.mxu0 0
        %1466 = vmatpush1.bf16.msra.mxu0 0
        %1467 = vmatprep.subr.bf16.mxu0 0
        %1468 = vmatpush1.bf16.msra.mxu0 0
        %1469 = vmatprep.subr.bf16.mxu0 0
        %1470 = vmatpush1.bf16.msra.mxu0 0
        %1471 = vmatprep.subr.bf16.mxu0 0
        %1472 = vmatpush1.bf16.msra.mxu0 0
        %1473 = vmatprep.subr.bf16.mxu0 0
        %1474 = vmatpush1.bf16.msra.mxu0 0
        %1475 = vmatprep.subr.bf16.mxu0 0
        %1476 = vmatpush1.bf16.msra.mxu0 %v1459
        %1477 = vmatprep.subr.bf16.mxu0 0
        %1478 = vmatpush2.bf16.msra.mxu0 0
        %1479 = vmatprep.subr.bf16.mxu0 0
        %1480 = vmatpush2.bf16.msra.mxu0 0
        %1481 = vmatprep.subr.bf16.mxu0 0
        %1482 = vmatpush2.bf16.msra.mxu0 0
        %1483 = vmatprep.subr.bf16.mxu0 0
        %1484 = vmatpush2.bf16.msra.mxu0 0
        %1485 = vmatprep.subr.bf16.mxu0 0
        %1486 = vmatpush2.bf16.msra.mxu0 0
        %1487 = vmatprep.subr.bf16.mxu0 0
        %1488 = vmatpush2.bf16.msra.mxu0 0
        %1489 = vmatprep.subr.bf16.mxu0 0
        %1490 = vmatpush2.bf16.msra.mxu0 0
        %1491 = vmatprep.subr.bf16.mxu0 0
        %1492 = vmatpush2.bf16.msra.mxu0 0
        %1493 = vmatprep.mubr.bf16.mxu0 0
        %1494 = vmatmul.mubr.bf16.gmra.mxu0 %v1456
        %v1495 = vpop.f32.mrf.mxu0
        %v1496 = vadd.f32 0.0, %v1495
        %v1497 = vpop.f32.mrf.mxu0
        %v1498 = vpop.f32.mrf.mxu0
        %v1499 = vpop.f32.mrf.mxu0
        %1500 = vdwg.mxu0
        %v1502 = vsel %vm933, %v1358, 0
        %v1505 = vsel %vm1173, %v1362, 0
        %1507 = vmatprep.subr.bf16.mxu0 0
        %1508 = vmatpush1.bf16.msra.mxu0 0
        %1509 = vmatprep.subr.bf16.mxu0 0
        %1510 = vmatpush1.bf16.msra.mxu0 0
        %1511 = vmatprep.subr.bf16.mxu0 0
        %1512 = vmatpush1.bf16.msra.mxu0 0
        %1513 = vmatprep.subr.bf16.mxu0 0
        %1514 = vmatpush1.bf16.msra.mxu0 0
        %1515 = vmatprep.subr.bf16.mxu0 0
        %1516 = vmatpush1.bf16.msra.mxu0 0
        %1517 = vmatprep.subr.bf16.mxu0 0
        %1518 = vmatpush1.bf16.msra.mxu0 0
        %1519 = vmatprep.subr.bf16.mxu0 0
        %1520 = vmatpush1.bf16.msra.mxu0 0
        %1521 = vmatprep.subr.bf16.mxu0 0
        %1522 = vmatpush1.bf16.msra.mxu0 %v1505
        %1523 = vmatprep.subr.bf16.mxu0 0
        %1524 = vmatpush2.bf16.msra.mxu0 0
        %1525 = vmatprep.subr.bf16.mxu0 0
        %1526 = vmatpush2.bf16.msra.mxu0 0
        %1527 = vmatprep.subr.bf16.mxu0 0
        %1528 = vmatpush2.bf16.msra.mxu0 0
        %1529 = vmatprep.subr.bf16.mxu0 0
        %1530 = vmatpush2.bf16.msra.mxu0 0
        %1531 = vmatprep.subr.bf16.mxu0 0
        %1532 = vmatpush2.bf16.msra.mxu0 0
        %1533 = vmatprep.subr.bf16.mxu0 0
        %1534 = vmatpush2.bf16.msra.mxu0 0
        %1535 = vmatprep.subr.bf16.mxu0 0
        %1536 = vmatpush2.bf16.msra.mxu0 0
        %1537 = vmatprep.subr.bf16.mxu0 0
        %1538 = vmatpush2.bf16.msra.mxu0 0
        %1539 = vmatprep.mubr.bf16.mxu0 0
        %1540 = vmatmul.mubr.bf16.gmra.mxu0 %v1502
        %v1541 = vpop.f32.mrf.mxu0
        %v1542 = vadd.f32 0.0, %v1541
        %v1543 = vpop.f32.mrf.mxu0
        %v1544 = vpop.f32.mrf.mxu0
        %v1545 = vpop.f32.mrf.mxu0
        %1546 = vdwg.mxu0
        %v1547 = vsel %vm277, %v1404, 0.0
        %v1548 = vsel %vm277, %v1450, 0.0
        %v1549 = vadd.f32 %v1547, %v1548
        %v1550 = vsel %vm277, %v1496, 0.0
        %v1551 = vadd.f32 %v1549, %v1550
        %v1552 = vsel %vm277, %v1542, 0.0
        %v1553 = vadd.f32 %v1551, %v1552
        %v1554 = vld [vmem:[%s5] sm:$0x1]
        %v1556 = vlaneseq
        %v1557 = vshrl.u32 %v1556, 7
        %v1558 = vsub.s32 0, %v1557
        %v1559 = vrot.slane %v1554, %v1558
        %v1561 = vadd.f32 %v1553, %v1559
        %1562 = vst.msk [vmem:[%s242] sm:$0xff] %vm277, %v1561
        %s1563 = sand.u32 %s159, 1
        %s1564 = scalar_lea.sflag [#allocation3], %s1563
        %s1565 = sand.u32 %s159, 1
        %s1566 = smul.addr %s1565, 8
        %s1567 = scalar_lea.vmem [#allocation2], %s1566
        // Predicated region
        $region45: #{tpu_custom_call.1} parent=43 // pred_check
          %p1568 = pneg %p169
        $region46: #{tpu_custom_call.1} parent=43 // pred_check_branch
          %1570 = sbr.rel (%p1568) target = $region48
        $region47: #{tpu_custom_call.1} parent=43 // pred_region
          %s1572 = ssub.s32 128, 128
          %1573 = vsyncadd %s1564, %s1572
          %s1574 = smul.addr %s20, 128
          %s1575 = scalar_lea.hbm %s6, %s1574
          %s1577 = sshll.u32 %s1567, 4
          %s1578 = int_to_ptr.vmem [resolvable:$true] %s1577
          %1580 = dma.vmem_to_hbm [thread:$0]  %s1578, 128, %s1575, %s1564
        $region48: #{tpu_custom_call.1} parent=43 // pred_fallthru
          _
      $region44: #{tpu_custom_call.1} parent=5 // pred_fallthru
        _
      %p1581 = scmp.le.s32.totalorder 2, %s15
      // Predicated region
      $region49: #{tpu_custom_call.1} parent=5 // pred_check
        %p1582 = pneg %p1581
      $region50: #{tpu_custom_call.1} parent=5 // pred_check_branch
        %1584 = sbr.rel (%p1582) target = $region52
      $region51: #{tpu_custom_call.1} parent=5 // pred_region
        %s1585 = ssub.s32 %s15, 2
        // Predicated region
        $region53: #{tpu_custom_call.1} parent=51 // pred_check
          %p1586 = pneg %p175
        $region54: #{tpu_custom_call.1} parent=51 // pred_check_branch
          %1588 = sbr.rel (%p1586) target = $region56
        $region55: #{tpu_custom_call.1} parent=51 // pred_region
          %s1589 = sand.u32 %s160, 1
          %s1590 = scalar_lea.sflag [#allocation3], %s1589
          %s1591 = sand.u32 %s160, 1
          %s1592 = smul.addr %s1591, 8
          %s1593 = scalar_lea.vmem [#allocation2], %s1592
          %1594 = dma.done %s1590, 128
        $region56: #{tpu_custom_call.1} parent=51 // pred_fallthru
          _
      $region52: #{tpu_custom_call.1} parent=5 // pred_fallthru
        _
    $region6: #{tpu_custom_call.1} parent=1 // loop_footer
      %s19 = sadd.s32 1, %s15
    $region7: #{tpu_custom_call.1} parent=1 // loop_footer_branch
      %14 = sbr.rel target = $region3
    $region8: #{tpu_custom_call.1} parent=1 // loop_exit
      _
    %1595 = vsyncpa [#allocation3], 1
    %s1596 = scalar_lea.sflag [#allocation3], 1
    %1597 = vsyncpa %s1596, 1

</llo_original>
